<compile_context>
chip_gen: v6e
topology: v6e:2x2x1
jax: 0.10.0
libtpu: 0.0.40
codegen_flags: <defaults>
</compile_context>

<pallas_src>
import math

import jax
import jax.numpy as jnp
from jax.experimental import pallas as pl
from jax.experimental.pallas import tpu as pltpu


def _lstm_textgen_kernel(gx_ref, h0_ref, c0_ref, whh_ref, wout_ref, bout_ref,
                         seq_ref, logits_ref, hT_ref, cT_ref):
    """Full T-step LSTM recurrence + hoisted vocab classifier.

    gx_ref:     [T, B, 4H]  x-side gate pre-activations (biases folded in,
                            g-gate lanes pre-scaled x2 upstream)
    h0_ref:     [B, H]
    c0_ref:     [B, H]
    whh_ref:    [H, 4H]     fused hidden->gate weights (g|i|f|o), g lanes x2
    wout_ref:   [H, V]      classifier weights (right-multiply layout)
    bout_ref:   [1, V]
    seq_ref:    [T*B, H]    flat slab of all LSTM hidden states
    logits_ref: [T*B, V]    flat slab of classifier outputs
    hT_ref:     [B, H]
    cT_ref:     [B, H]
    """
    T = gx_ref.shape[0]
    B = gx_ref.shape[1]
    H = h0_ref.shape[-1]

    # Loop-invariant load (reused every step).
    whh = whh_ref[...]

    # Per-lane post-affine so ONE full-vreg sigmoid serves all four gates:
    # g lanes (0:H) were pre-scaled x2 upstream, so tanh(x) = 2*sigmoid(2x)-1.
    lane = jax.lax.broadcasted_iota(jnp.int32, (B, 4 * H), 1)
    is_g = lane < H
    post_mul = jnp.where(is_g, 2.0, 1.0).astype(jnp.float32)
    post_add = jnp.where(is_g, -1.0, 0.0).astype(jnp.float32)

    def step(t, carry):
        h_prev, c_prev = carry
        # The only serial matmul: one [B, H] x [H, 4H] MXU push per step.
        # (bf16 operands here help on v6e/v7x but need a looser tolerance;
        #  kept f32 for exactness and for v5e's f32-only VPU/EUP path.)
        gates = gx_ref[t] + jnp.dot(h_prev, whh,
                                    preferred_element_type=jnp.float32)
        s = jax.nn.sigmoid(gates)            # single 128-lane EUP push
        act = s * post_mul + post_add        # g lanes become tanh, rest sigmoid
        g = act[:, 0 * H:1 * H]
        i = act[:, 1 * H:2 * H]
        f = act[:, 2 * H:3 * H]
        o = act[:, 3 * H:4 * H]
        c = g * i + c_prev * f
        h = jnp.tanh(c) * o
        row = pl.multiple_of(t * B, B)
        seq_ref[pl.ds(row, B), :] = h
        return h, c

    h_T, c_T = jax.lax.fori_loop(0, T, step, (h0_ref[...], c0_ref[...]),
                                 unroll=8)   # bounded unroll (full at T=8)

    # Final-state outputs written exactly once.
    hT_ref[...] = h_T
    cT_ref[...] = c_T

    # Classifier hoisted off the serial path: one batched matmul over all
    # stored hidden states, bias added once, single dense store.
    # TODO(synk): at realistic V on v7x this would be better as a separate
    # pallas_call with a parallel grid so both TensorCores share the FLOPs.
    logits_ref[...] = (jnp.dot(seq_ref[...], wout_ref[...],
                               preferred_element_type=jnp.float32)
                       + bout_ref[...])


@jax.jit
def text_generation_forward(tokens, h_0, c_0, params):
    """Pallas equivalent of TextGenerationModel.forward.

    tokens: [T, B] int32 token ids
    h_0, c_0: [B, H] float32 initial LSTM state
    returns: (logits [T, B, V], seq [T, B, H], h_T [B, H], c_T [B, H])
    """
    T, B = tokens.shape
    V, E = params["embedding"].shape
    H = h_0.shape[-1]

    # Fuse the four gates: [E, 4H], [H, 4H], [4H]  (order: g | i | f | o).
    W_x_cat = jnp.concatenate(
        [params["W_gx"], params["W_ix"], params["W_fx"], params["W_ox"]], axis=1)
    W_h_cat = jnp.concatenate(
        [params["W_gh"], params["W_ih"], params["W_fh"], params["W_oh"]], axis=1)
    b_cat = jnp.concatenate(
        [params["b_g"], params["b_i"], params["b_f"], params["b_o"]], axis=0)

    # Pre-scale the g-gate lanes by 2 (done once, off the serial path) so the
    # kernel needs only a single full-vreg sigmoid: tanh(x) = 2*sigmoid(2x)-1.
    g_scale = jnp.concatenate(
        [jnp.full((H,), 2.0, jnp.float32), jnp.ones((3 * H,), jnp.float32)])

    # Fuse embedding lookup + input projection + biases into one table:
    # gate_table[v] = embed_table[v] @ W_x_cat + b_cat (then g-lane pre-scale),
    # so the x-side work is one [V,E]x[E,4H] matmul done once, off the
    # recurrence critical path.
    gate_table = (params["embedding"] @ W_x_cat + b_cat[None, :]) * g_scale[None, :]
    W_h_scaled = W_h_cat * g_scale[None, :]

    # TODO(synk): the token-id gather stays in XLA (jnp.take); a per-row Pallas
    # gather would only reintroduce per-step overhead at these sizes.
    gx = jnp.take(gate_table, tokens, axis=0)                      # [T, B, 4H]

    bout = params["b_out"].reshape(1, V)

    vmem = pl.BlockSpec(memory_space=pltpu.MemorySpace.VMEM)

    seq_flat, logits_flat, h_T, c_T = pl.pallas_call(
        _lstm_textgen_kernel,
        out_shape=(
            jax.ShapeDtypeStruct((T * B, H), jnp.float32),
            jax.ShapeDtypeStruct((T * B, V), jnp.float32),
            jax.ShapeDtypeStruct((B, H), jnp.float32),
            jax.ShapeDtypeStruct((B, H), jnp.float32),
        ),
        in_specs=[vmem] * 6,
        out_specs=(vmem, vmem, vmem, vmem),
        compiler_params=pltpu.CompilerParams(
            vmem_limit_bytes=32 * 1024 * 1024),
    )(gx, h_0, c_0, W_h_scaled, params["W_out"], bout)

    seq = seq_flat.reshape(T, B, H)
    logits = logits_flat.reshape(T, B, V)
    return logits, seq, h_T, c_T


def init_params(key, vocab_size, embed_dim, hidden_dim):
    """Deterministic init matching the PyTorch module.

    LSTM params ~ U(-stdv, stdv), stdv = 1/sqrt(hidden_dim).
    Note: in the reference, `param.data.uniform_(-stdv, stdv) + 1` for b_f is a
    no-op (the +1 is not in-place), so b_f is plain uniform too.
    Linear is stored as W_out [H, V] (PyTorch's [V, H] transposed) so the
    kernel can right-multiply.
    """
    stdv = 1.0 / math.sqrt(hidden_dim)
    ks = jax.random.split(key, 15)
    u = lambda k, shape: jax.random.uniform(k, shape, jnp.float32, -stdv, stdv)
    return {
        "embedding": jax.random.normal(ks[0], (vocab_size, embed_dim),
                                       jnp.float32),
        "W_gx": u(ks[1], (embed_dim, hidden_dim)),
        "W_gh": u(ks[2], (hidden_dim, hidden_dim)),
        "b_g": u(ks[3], (hidden_dim,)),
        "W_ix": u(ks[4], (embed_dim, hidden_dim)),
        "W_ih": u(ks[5], (hidden_dim, hidden_dim)),
        "b_i": u(ks[6], (hidden_dim,)),
        "W_fx": u(ks[7], (embed_dim, hidden_dim)),
        "W_fh": u(ks[8], (hidden_dim, hidden_dim)),
        "b_f": u(ks[9], (hidden_dim,)),
        "W_ox": u(ks[10], (embed_dim, hidden_dim)),
        "W_oh": u(ks[11], (hidden_dim, hidden_dim)),
        "b_o": u(ks[12], (hidden_dim,)),
        "W_out": u(ks[13], (hidden_dim, vocab_size)),
        "b_out": u(ks[14], (vocab_size,)),
    }


def text_generation_forward_ref(tokens, h_0, c_0, p):
    """Pure-JAX reference matching the PyTorch forward exactly."""
    embeds = p["embedding"][tokens]                    # [T, B, E]

    def step(carry, x):
        h_prev, c_prev = carry
        g = jnp.tanh(x @ p["W_gx"] + h_prev @ p["W_gh"] + p["b_g"])
        i = jax.nn.sigmoid(x @ p["W_ix"] + h_prev @ p["W_ih"] + p["b_i"])
        f = jax.nn.sigmoid(x @ p["W_fx"] + h_prev @ p["W_fh"] + p["b_f"])
        o = jax.nn.sigmoid(x @ p["W_ox"] + h_prev @ p["W_oh"] + p["b_o"])
        c = g * i + c_prev * f
        h = jnp.tanh(c) * o
        return (h, c), h

    (h_T, c_T), seq = jax.lax.scan(step, (h_0, c_0), embeds)
    logits = seq @ p["W_out"] + p["b_out"]
    return logits, seq, h_T, c_T


if __name__ == "__main__":
    # seq-len, batch, embedding_size, lstm_hidden_dim, vocabulary_size
    # B=8 fills the 8 sublanes; 4H = 128 is exactly one lane-dense vreg width.
    T, B, E, H, V = 8, 8, 16, 32, 64

    key = jax.random.PRNGKey(0)
    k_param, k_tok, k_h, k_c = jax.random.split(key, 4)

    params = init_params(k_param, V, E, H)
    tokens = jax.random.randint(k_tok, (T, B), 0, V, dtype=jnp.int32)
    h_0 = jax.random.normal(k_h, (B, H), dtype=jnp.float32)
    c_0 = jax.random.normal(k_c, (B, H), dtype=jnp.float32)

    logits, seq, h_T, c_T = text_generation_forward(tokens, h_0, c_0, params)
    jax.block_until_ready((logits, seq, h_T, c_T))

    logits_r, seq_r, h_r, c_r = text_generation_forward_ref(
        tokens, h_0, c_0, params)

    assert logits.shape == (T, B, V)
    assert seq.shape == (T, B, H)
    assert h_T.shape == (B, H) and c_T.shape == (B, H)
    assert jnp.allclose(seq, seq_r, atol=1e-4, rtol=1e-4)
    assert jnp.allclose(h_T, h_r, atol=1e-4, rtol=1e-4)
    assert jnp.allclose(c_T, c_r, atol=1e-4, rtol=1e-4)
    assert jnp.allclose(logits, logits_r, atol=1e-4, rtol=1e-4)

    print("KERNEL_OK")
</pallas_src>

<mosaic_0001>
module attributes {stable_mosaic.version = 11 : i64} {
  func.func @_lstm_textgen_kernel(%arg0: memref<8x8x128xf32, #tpu.memory_space<vmem>>, %arg1: memref<8x32xf32, #tpu.memory_space<vmem>>, %arg2: memref<8x32xf32, #tpu.memory_space<vmem>>, %arg3: memref<32x128xf32, #tpu.memory_space<vmem>>, %arg4: memref<32x64xf32, #tpu.memory_space<vmem>>, %arg5: memref<1x64xf32, #tpu.memory_space<vmem>>, %arg6: memref<64x32xf32, #tpu.memory_space<vmem>>, %arg7: memref<64x64xf32, #tpu.memory_space<vmem>>, %arg8: memref<8x32xf32, #tpu.memory_space<vmem>>, %arg9: memref<8x32xf32, #tpu.memory_space<vmem>>) attributes {dimension_semantics = [], scalar_prefetch = 0 : i64, scratch_operands = 0 : i64, tpu.core_type = #tpu.core_type<tc>} {
    %c0 = arith.constant 0 : index
    %c0_0 = arith.constant 0 : index
    %0 = vector.load %arg3[%c0, %c0_0] : memref<32x128xf32, #tpu.memory_space<vmem>>, vector<32x128xf32>
    %1 = tpu.iota {dimensions = array<i32: 1>} : vector<8x128xi32>
    %c32_i32 = arith.constant 32 : i32
    %2 = vector.broadcast %c32_i32 : i32 to vector<8x128xi32>
    %3 = arith.cmpi slt, %1, %2 : vector<8x128xi32>
    %cst = arith.constant 2.000000e+00 : f32
    %cst_1 = arith.constant 1.000000e+00 : f32
    %4 = vector.broadcast %cst : f32 to vector<8x128xf32>
    %5 = vector.broadcast %cst_1 : f32 to vector<8x128xf32>
    %6 = arith.select %3, %4, %5 : vector<8x128xi1>, vector<8x128xf32>
    %cst_2 = arith.constant -1.000000e+00 : f32
    %cst_3 = arith.constant 0.000000e+00 : f32
    %7 = vector.broadcast %cst_2 : f32 to vector<8x128xf32>
    %8 = vector.broadcast %cst_3 : f32 to vector<8x128xf32>
    %9 = arith.select %3, %7, %8 : vector<8x128xi1>, vector<8x128xf32>
    %c0_4 = arith.constant 0 : index
    %c0_5 = arith.constant 0 : index
    %10 = vector.load %arg1[%c0_4, %c0_5] : memref<8x32xf32, #tpu.memory_space<vmem>>, vector<8x32xf32>
    %c0_6 = arith.constant 0 : index
    %c0_7 = arith.constant 0 : index
    %11 = vector.load %arg2[%c0_6, %c0_7] : memref<8x32xf32, #tpu.memory_space<vmem>>, vector<8x32xf32>
    %c0_i32 = arith.constant 0 : i32
    %12 = arith.index_cast %c0_i32 : i32 to index
    %c0_8 = arith.constant 0 : index
    %c0_9 = arith.constant 0 : index
    %13 = vector.load %arg0[%12, %c0_8, %c0_9] : memref<8x8x128xf32, #tpu.memory_space<vmem>>, vector<1x8x128xf32>
    %14 = vector.shape_cast %13 : vector<1x8x128xf32> to vector<8x128xf32>
    %cst_10 = arith.constant dense<0.000000e+00> : vector<8x128xf32>
    %15 = tpu.matmul %10, %0, %cst_10 {dimension_numbers = #tpu.dot_dimension_numbers<[1], [0], [0], [1], [0, 0, 1, 1], [], []>} : vector<8x32xf32>, vector<32x128xf32>, vector<8x128xf32> -> vector<8x128xf32>
    %16 = arith.addf %14, %15 : vector<8x128xf32>
    %17 = arith.negf %16 : vector<8x128xf32>
    %18 = math.exp %17 : vector<8x128xf32>
    %cst_11 = arith.constant 1.000000e+00 : f32
    %19 = vector.broadcast %cst_11 : f32 to vector<8x128xf32>
    %20 = arith.addf %19, %18 : vector<8x128xf32>
    %21 = arith.divf %19, %20 : vector<8x128xf32>
    %22 = arith.mulf %21, %6 : vector<8x128xf32>
    %23 = arith.addf %22, %9 : vector<8x128xf32>
    %24 = vector.extract_strided_slice %23 {offsets = [0, 0], sizes = [8, 32], strides = [1, 1]} : vector<8x128xf32> to vector<8x32xf32>
    %25 = vector.extract_strided_slice %23 {offsets = [0, 32], sizes = [8, 32], strides = [1, 1]} : vector<8x128xf32> to vector<8x32xf32>
    %26 = vector.extract_strided_slice %23 {offsets = [0, 64], sizes = [8, 32], strides = [1, 1]} : vector<8x128xf32> to vector<8x32xf32>
    %27 = vector.extract_strided_slice %23 {offsets = [0, 96], sizes = [8, 32], strides = [1, 1]} : vector<8x128xf32> to vector<8x32xf32>
    %28 = arith.mulf %24, %25 : vector<8x32xf32>
    %29 = arith.mulf %11, %26 : vector<8x32xf32>
    %30 = arith.addf %28, %29 : vector<8x32xf32>
    %31 = math.tanh %30 : vector<8x32xf32>
    %32 = arith.mulf %31, %27 : vector<8x32xf32>
    %c8_i32 = arith.constant 8 : i32
    %33 = arith.muli %c0_i32, %c8_i32 : i32
    %34 = tpu.assume_multiple %33, 8 : i32
    %35 = arith.index_cast %34 : i32 to index
    %c0_12 = arith.constant 0 : index
    %36 = vector.load %arg6[%35, %c0_12] : memref<64x32xf32, #tpu.memory_space<vmem>>, vector<8x32xf32>
    tpu.vector_store %arg6[%35, %c0_12], %32 {strides = array<i32>} : memref<64x32xf32, #tpu.memory_space<vmem>>, vector<8x32xf32>,
    %c1_i32 = arith.constant 1 : i32
    %37 = arith.index_cast %c1_i32 : i32 to index
    %c0_13 = arith.constant 0 : index
    %c0_14 = arith.constant 0 : index
    %38 = vector.load %arg0[%37, %c0_13, %c0_14] : memref<8x8x128xf32, #tpu.memory_space<vmem>>, vector<1x8x128xf32>
    %39 = vector.shape_cast %38 : vector<1x8x128xf32> to vector<8x128xf32>
    %cst_15 = arith.constant dense<0.000000e+00> : vector<8x128xf32>
    %40 = tpu.matmul %32, %0, %cst_15 {dimension_numbers = #tpu.dot_dimension_numbers<[1], [0], [0], [1], [0, 0, 1, 1], [], []>} : vector<8x32xf32>, vector<32x128xf32>, vector<8x128xf32> -> vector<8x128xf32>
    %41 = arith.addf %39, %40 : vector<8x128xf32>
    %42 = arith.negf %41 : vector<8x128xf32>
    %43 = math.exp %42 : vector<8x128xf32>
    %cst_16 = arith.constant 1.000000e+00 : f32
    %44 = vector.broadcast %cst_16 : f32 to vector<8x128xf32>
    %45 = arith.addf %44, %43 : vector<8x128xf32>
    %46 = arith.divf %44, %45 : vector<8x128xf32>
    %47 = arith.mulf %46, %6 : vector<8x128xf32>
    %48 = arith.addf %47, %9 : vector<8x128xf32>
    %49 = vector.extract_strided_slice %48 {offsets = [0, 0], sizes = [8, 32], strides = [1, 1]} : vector<8x128xf32> to vector<8x32xf32>
    %50 = vector.extract_strided_slice %48 {offsets = [0, 32], sizes = [8, 32], strides = [1, 1]} : vector<8x128xf32> to vector<8x32xf32>
    %51 = vector.extract_strided_slice %48 {offsets = [0, 64], sizes = [8, 32], strides = [1, 1]} : vector<8x128xf32> to vector<8x32xf32>
    %52 = vector.extract_strided_slice %48 {offsets = [0, 96], sizes = [8, 32], strides = [1, 1]} : vector<8x128xf32> to vector<8x32xf32>
    %53 = arith.mulf %49, %50 : vector<8x32xf32>
    %54 = arith.mulf %30, %51 : vector<8x32xf32>
    %55 = arith.addf %53, %54 : vector<8x32xf32>
    %56 = math.tanh %55 : vector<8x32xf32>
    %57 = arith.mulf %56, %52 : vector<8x32xf32>
    %c8_i32_17 = arith.constant 8 : i32
    %58 = arith.muli %c1_i32, %c8_i32_17 : i32
    %59 = tpu.assume_multiple %58, 8 : i32
    %60 = arith.index_cast %59 : i32 to index
    %c0_18 = arith.constant 0 : index
    %61 = vector.load %arg6[%60, %c0_18] : memref<64x32xf32, #tpu.memory_space<vmem>>, vector<8x32xf32>
    tpu.vector_store %arg6[%60, %c0_18], %57 {strides = array<i32>} : memref<64x32xf32, #tpu.memory_space<vmem>>, vector<8x32xf32>,
    %c2_i32 = arith.constant 2 : i32
    %62 = arith.index_cast %c2_i32 : i32 to index
    %c0_19 = arith.constant 0 : index
    %c0_20 = arith.constant 0 : index
    %63 = vector.load %arg0[%62, %c0_19, %c0_20] : memref<8x8x128xf32, #tpu.memory_space<vmem>>, vector<1x8x128xf32>
    %64 = vector.shape_cast %63 : vector<1x8x128xf32> to vector<8x128xf32>
    %cst_21 = arith.constant dense<0.000000e+00> : vector<8x128xf32>
    %65 = tpu.matmul %57, %0, %cst_21 {dimension_numbers = #tpu.dot_dimension_numbers<[1], [0], [0], [1], [0, 0, 1, 1], [], []>} : vector<8x32xf32>, vector<32x128xf32>, vector<8x128xf32> -> vector<8x128xf32>
    %66 = arith.addf %64, %65 : vector<8x128xf32>
    %67 = arith.negf %66 : vector<8x128xf32>
    %68 = math.exp %67 : vector<8x128xf32>
    %cst_22 = arith.constant 1.000000e+00 : f32
    %69 = vector.broadcast %cst_22 : f32 to vector<8x128xf32>
    %70 = arith.addf %69, %68 : vector<8x128xf32>
    %71 = arith.divf %69, %70 : vector<8x128xf32>
    %72 = arith.mulf %71, %6 : vector<8x128xf32>
    %73 = arith.addf %72, %9 : vector<8x128xf32>
    %74 = vector.extract_strided_slice %73 {offsets = [0, 0], sizes = [8, 32], strides = [1, 1]} : vector<8x128xf32> to vector<8x32xf32>
    %75 = vector.extract_strided_slice %73 {offsets = [0, 32], sizes = [8, 32], strides = [1, 1]} : vector<8x128xf32> to vector<8x32xf32>
    %76 = vector.extract_strided_slice %73 {offsets = [0, 64], sizes = [8, 32], strides = [1, 1]} : vector<8x128xf32> to vector<8x32xf32>
    %77 = vector.extract_strided_slice %73 {offsets = [0, 96], sizes = [8, 32], strides = [1, 1]} : vector<8x128xf32> to vector<8x32xf32>
    %78 = arith.mulf %74, %75 : vector<8x32xf32>
    %79 = arith.mulf %55, %76 : vector<8x32xf32>
    %80 = arith.addf %78, %79 : vector<8x32xf32>
    %81 = math.tanh %80 : vector<8x32xf32>
    %82 = arith.mulf %81, %77 : vector<8x32xf32>
    %c8_i32_23 = arith.constant 8 : i32
    %83 = arith.muli %c2_i32, %c8_i32_23 : i32
    %84 = tpu.assume_multiple %83, 8 : i32
    %85 = arith.index_cast %84 : i32 to index
    %c0_24 = arith.constant 0 : index
    %86 = vector.load %arg6[%85, %c0_24] : memref<64x32xf32, #tpu.memory_space<vmem>>, vector<8x32xf32>
    tpu.vector_store %arg6[%85, %c0_24], %82 {strides = array<i32>} : memref<64x32xf32, #tpu.memory_space<vmem>>, vector<8x32xf32>,
    %c3_i32 = arith.constant 3 : i32
    %87 = arith.index_cast %c3_i32 : i32 to index
    %c0_25 = arith.constant 0 : index
    %c0_26 = arith.constant 0 : index
    %88 = vector.load %arg0[%87, %c0_25, %c0_26] : memref<8x8x128xf32, #tpu.memory_space<vmem>>, vector<1x8x128xf32>
    %89 = vector.shape_cast %88 : vector<1x8x128xf32> to vector<8x128xf32>
    %cst_27 = arith.constant dense<0.000000e+00> : vector<8x128xf32>
    %90 = tpu.matmul %82, %0, %cst_27 {dimension_numbers = #tpu.dot_dimension_numbers<[1], [0], [0], [1], [0, 0, 1, 1], [], []>} : vector<8x32xf32>, vector<32x128xf32>, vector<8x128xf32> -> vector<8x128xf32>
    %91 = arith.addf %89, %90 : vector<8x128xf32>
    %92 = arith.negf %91 : vector<8x128xf32>
    %93 = math.exp %92 : vector<8x128xf32>
    %cst_28 = arith.constant 1.000000e+00 : f32
    %94 = vector.broadcast %cst_28 : f32 to vector<8x128xf32>
    %95 = arith.addf %94, %93 : vector<8x128xf32>
    %96 = arith.divf %94, %95 : vector<8x128xf32>
    %97 = arith.mulf %96, %6 : vector<8x128xf32>
    %98 = arith.addf %97, %9 : vector<8x128xf32>
    %99 = vector.extract_strided_slice %98 {offsets = [0, 0], sizes = [8, 32], strides = [1, 1]} : vector<8x128xf32> to vector<8x32xf32>
    %100 = vector.extract_strided_slice %98 {offsets = [0, 32], sizes = [8, 32], strides = [1, 1]} : vector<8x128xf32> to vector<8x32xf32>
    %101 = vector.extract_strided_slice %98 {offsets = [0, 64], sizes = [8, 32], strides = [1, 1]} : vector<8x128xf32> to vector<8x32xf32>
    %102 = vector.extract_strided_slice %98 {offsets = [0, 96], sizes = [8, 32], strides = [1, 1]} : vector<8x128xf32> to vector<8x32xf32>
    %103 = arith.mulf %99, %100 : vector<8x32xf32>
    %104 = arith.mulf %80, %101 : vector<8x32xf32>
    %105 = arith.addf %103, %104 : vector<8x32xf32>
    %106 = math.tanh %105 : vector<8x32xf32>
    %107 = arith.mulf %106, %102 : vector<8x32xf32>
    %c8_i32_29 = arith.constant 8 : i32
    %108 = arith.muli %c3_i32, %c8_i32_29 : i32
    %109 = tpu.assume_multiple %108, 8 : i32
    %110 = arith.index_cast %109 : i32 to index
    %c0_30 = arith.constant 0 : index
    %111 = vector.load %arg6[%110, %c0_30] : memref<64x32xf32, #tpu.memory_space<vmem>>, vector<8x32xf32>
    tpu.vector_store %arg6[%110, %c0_30], %107 {strides = array<i32>} : memref<64x32xf32, #tpu.memory_space<vmem>>, vector<8x32xf32>,
    %c4_i32 = arith.constant 4 : i32
    %112 = arith.index_cast %c4_i32 : i32 to index
    %c0_31 = arith.constant 0 : index
    %c0_32 = arith.constant 0 : index
    %113 = vector.load %arg0[%112, %c0_31, %c0_32] : memref<8x8x128xf32, #tpu.memory_space<vmem>>, vector<1x8x128xf32>
    %114 = vector.shape_cast %113 : vector<1x8x128xf32> to vector<8x128xf32>
    %cst_33 = arith.constant dense<0.000000e+00> : vector<8x128xf32>
    %115 = tpu.matmul %107, %0, %cst_33 {dimension_numbers = #tpu.dot_dimension_numbers<[1], [0], [0], [1], [0, 0, 1, 1], [], []>} : vector<8x32xf32>, vector<32x128xf32>, vector<8x128xf32> -> vector<8x128xf32>
    %116 = arith.addf %114, %115 : vector<8x128xf32>
    %117 = arith.negf %116 : vector<8x128xf32>
    %118 = math.exp %117 : vector<8x128xf32>
    %cst_34 = arith.constant 1.000000e+00 : f32
    %119 = vector.broadcast %cst_34 : f32 to vector<8x128xf32>
    %120 = arith.addf %119, %118 : vector<8x128xf32>
    %121 = arith.divf %119, %120 : vector<8x128xf32>
    %122 = arith.mulf %121, %6 : vector<8x128xf32>
    %123 = arith.addf %122, %9 : vector<8x128xf32>
    %124 = vector.extract_strided_slice %123 {offsets = [0, 0], sizes = [8, 32], strides = [1, 1]} : vector<8x128xf32> to vector<8x32xf32>
    %125 = vector.extract_strided_slice %123 {offsets = [0, 32], sizes = [8, 32], strides = [1, 1]} : vector<8x128xf32> to vector<8x32xf32>
    %126 = vector.extract_strided_slice %123 {offsets = [0, 64], sizes = [8, 32], strides = [1, 1]} : vector<8x128xf32> to vector<8x32xf32>
    %127 = vector.extract_strided_slice %123 {offsets = [0, 96], sizes = [8, 32], strides = [1, 1]} : vector<8x128xf32> to vector<8x32xf32>
    %128 = arith.mulf %124, %125 : vector<8x32xf32>
    %129 = arith.mulf %105, %126 : vector<8x32xf32>
    %130 = arith.addf %128, %129 : vector<8x32xf32>
    %131 = math.tanh %130 : vector<8x32xf32>
    %132 = arith.mulf %131, %127 : vector<8x32xf32>
    %c8_i32_35 = arith.constant 8 : i32
    %133 = arith.muli %c4_i32, %c8_i32_35 : i32
    %134 = tpu.assume_multiple %133, 8 : i32
    %135 = arith.index_cast %134 : i32 to index
    %c0_36 = arith.constant 0 : index
    %136 = vector.load %arg6[%135, %c0_36] : memref<64x32xf32, #tpu.memory_space<vmem>>, vector<8x32xf32>
    tpu.vector_store %arg6[%135, %c0_36], %132 {strides = array<i32>} : memref<64x32xf32, #tpu.memory_space<vmem>>, vector<8x32xf32>,
    %c5_i32 = arith.constant 5 : i32
    %137 = arith.index_cast %c5_i32 : i32 to index
    %c0_37 = arith.constant 0 : index
    %c0_38 = arith.constant 0 : index
    %138 = vector.load %arg0[%137, %c0_37, %c0_38] : memref<8x8x128xf32, #tpu.memory_space<vmem>>, vector<1x8x128xf32>
    %139 = vector.shape_cast %138 : vector<1x8x128xf32> to vector<8x128xf32>
    %cst_39 = arith.constant dense<0.000000e+00> : vector<8x128xf32>
    %140 = tpu.matmul %132, %0, %cst_39 {dimension_numbers = #tpu.dot_dimension_numbers<[1], [0], [0], [1], [0, 0, 1, 1], [], []>} : vector<8x32xf32>, vector<32x128xf32>, vector<8x128xf32> -> vector<8x128xf32>
    %141 = arith.addf %139, %140 : vector<8x128xf32>
    %142 = arith.negf %141 : vector<8x128xf32>
    %143 = math.exp %142 : vector<8x128xf32>
    %cst_40 = arith.constant 1.000000e+00 : f32
    %144 = vector.broadcast %cst_40 : f32 to vector<8x128xf32>
    %145 = arith.addf %144, %143 : vector<8x128xf32>
    %146 = arith.divf %144, %145 : vector<8x128xf32>
    %147 = arith.mulf %146, %6 : vector<8x128xf32>
    %148 = arith.addf %147, %9 : vector<8x128xf32>
    %149 = vector.extract_strided_slice %148 {offsets = [0, 0], sizes = [8, 32], strides = [1, 1]} : vector<8x128xf32> to vector<8x32xf32>
    %150 = vector.extract_strided_slice %148 {offsets = [0, 32], sizes = [8, 32], strides = [1, 1]} : vector<8x128xf32> to vector<8x32xf32>
    %151 = vector.extract_strided_slice %148 {offsets = [0, 64], sizes = [8, 32], strides = [1, 1]} : vector<8x128xf32> to vector<8x32xf32>
    %152 = vector.extract_strided_slice %148 {offsets = [0, 96], sizes = [8, 32], strides = [1, 1]} : vector<8x128xf32> to vector<8x32xf32>
    %153 = arith.mulf %149, %150 : vector<8x32xf32>
    %154 = arith.mulf %130, %151 : vector<8x32xf32>
    %155 = arith.addf %153, %154 : vector<8x32xf32>
    %156 = math.tanh %155 : vector<8x32xf32>
    %157 = arith.mulf %156, %152 : vector<8x32xf32>
    %c8_i32_41 = arith.constant 8 : i32
    %158 = arith.muli %c5_i32, %c8_i32_41 : i32
    %159 = tpu.assume_multiple %158, 8 : i32
    %160 = arith.index_cast %159 : i32 to index
    %c0_42 = arith.constant 0 : index
    %161 = vector.load %arg6[%160, %c0_42] : memref<64x32xf32, #tpu.memory_space<vmem>>, vector<8x32xf32>
    tpu.vector_store %arg6[%160, %c0_42], %157 {strides = array<i32>} : memref<64x32xf32, #tpu.memory_space<vmem>>, vector<8x32xf32>,
    %c6_i32 = arith.constant 6 : i32
    %162 = arith.index_cast %c6_i32 : i32 to index
    %c0_43 = arith.constant 0 : index
    %c0_44 = arith.constant 0 : index
    %163 = vector.load %arg0[%162, %c0_43, %c0_44] : memref<8x8x128xf32, #tpu.memory_space<vmem>>, vector<1x8x128xf32>
    %164 = vector.shape_cast %163 : vector<1x8x128xf32> to vector<8x128xf32>
    %cst_45 = arith.constant dense<0.000000e+00> : vector<8x128xf32>
    %165 = tpu.matmul %157, %0, %cst_45 {dimension_numbers = #tpu.dot_dimension_numbers<[1], [0], [0], [1], [0, 0, 1, 1], [], []>} : vector<8x32xf32>, vector<32x128xf32>, vector<8x128xf32> -> vector<8x128xf32>
    %166 = arith.addf %164, %165 : vector<8x128xf32>
    %167 = arith.negf %166 : vector<8x128xf32>
    %168 = math.exp %167 : vector<8x128xf32>
    %cst_46 = arith.constant 1.000000e+00 : f32
    %169 = vector.broadcast %cst_46 : f32 to vector<8x128xf32>
    %170 = arith.addf %169, %168 : vector<8x128xf32>
    %171 = arith.divf %169, %170 : vector<8x128xf32>
    %172 = arith.mulf %171, %6 : vector<8x128xf32>
    %173 = arith.addf %172, %9 : vector<8x128xf32>
    %174 = vector.extract_strided_slice %173 {offsets = [0, 0], sizes = [8, 32], strides = [1, 1]} : vector<8x128xf32> to vector<8x32xf32>
    %175 = vector.extract_strided_slice %173 {offsets = [0, 32], sizes = [8, 32], strides = [1, 1]} : vector<8x128xf32> to vector<8x32xf32>
    %176 = vector.extract_strided_slice %173 {offsets = [0, 64], sizes = [8, 32], strides = [1, 1]} : vector<8x128xf32> to vector<8x32xf32>
    %177 = vector.extract_strided_slice %173 {offsets = [0, 96], sizes = [8, 32], strides = [1, 1]} : vector<8x128xf32> to vector<8x32xf32>
    %178 = arith.mulf %174, %175 : vector<8x32xf32>
    %179 = arith.mulf %155, %176 : vector<8x32xf32>
    %180 = arith.addf %178, %179 : vector<8x32xf32>
    %181 = math.tanh %180 : vector<8x32xf32>
    %182 = arith.mulf %181, %177 : vector<8x32xf32>
    %c8_i32_47 = arith.constant 8 : i32
    %183 = arith.muli %c6_i32, %c8_i32_47 : i32
    %184 = tpu.assume_multiple %183, 8 : i32
    %185 = arith.index_cast %184 : i32 to index
    %c0_48 = arith.constant 0 : index
    %186 = vector.load %arg6[%185, %c0_48] : memref<64x32xf32, #tpu.memory_space<vmem>>, vector<8x32xf32>
    tpu.vector_store %arg6[%185, %c0_48], %182 {strides = array<i32>} : memref<64x32xf32, #tpu.memory_space<vmem>>, vector<8x32xf32>,
    %c7_i32 = arith.constant 7 : i32
    %187 = arith.index_cast %c7_i32 : i32 to index
    %c0_49 = arith.constant 0 : index
    %c0_50 = arith.constant 0 : index
    %188 = vector.load %arg0[%187, %c0_49, %c0_50] : memref<8x8x128xf32, #tpu.memory_space<vmem>>, vector<1x8x128xf32>
    %189 = vector.shape_cast %188 : vector<1x8x128xf32> to vector<8x128xf32>
    %cst_51 = arith.constant dense<0.000000e+00> : vector<8x128xf32>
    %190 = tpu.matmul %182, %0, %cst_51 {dimension_numbers = #tpu.dot_dimension_numbers<[1], [0], [0], [1], [0, 0, 1, 1], [], []>} : vector<8x32xf32>, vector<32x128xf32>, vector<8x128xf32> -> vector<8x128xf32>
    %191 = arith.addf %189, %190 : vector<8x128xf32>
    %192 = arith.negf %191 : vector<8x128xf32>
    %193 = math.exp %192 : vector<8x128xf32>
    %cst_52 = arith.constant 1.000000e+00 : f32
    %194 = vector.broadcast %cst_52 : f32 to vector<8x128xf32>
    %195 = arith.addf %194, %193 : vector<8x128xf32>
    %196 = arith.divf %194, %195 : vector<8x128xf32>
    %197 = arith.mulf %196, %6 : vector<8x128xf32>
    %198 = arith.addf %197, %9 : vector<8x128xf32>
    %199 = vector.extract_strided_slice %198 {offsets = [0, 0], sizes = [8, 32], strides = [1, 1]} : vector<8x128xf32> to vector<8x32xf32>
    %200 = vector.extract_strided_slice %198 {offsets = [0, 32], sizes = [8, 32], strides = [1, 1]} : vector<8x128xf32> to vector<8x32xf32>
    %201 = vector.extract_strided_slice %198 {offsets = [0, 64], sizes = [8, 32], strides = [1, 1]} : vector<8x128xf32> to vector<8x32xf32>
    %202 = vector.extract_strided_slice %198 {offsets = [0, 96], sizes = [8, 32], strides = [1, 1]} : vector<8x128xf32> to vector<8x32xf32>
    %203 = arith.mulf %199, %200 : vector<8x32xf32>
    %204 = arith.mulf %180, %201 : vector<8x32xf32>
    %205 = arith.addf %203, %204 : vector<8x32xf32>
    %206 = math.tanh %205 : vector<8x32xf32>
    %207 = arith.mulf %206, %202 : vector<8x32xf32>
    %c8_i32_53 = arith.constant 8 : i32
    %208 = arith.muli %c7_i32, %c8_i32_53 : i32
    %209 = tpu.assume_multiple %208, 8 : i32
    %210 = arith.index_cast %209 : i32 to index
    %c0_54 = arith.constant 0 : index
    %211 = vector.load %arg6[%210, %c0_54] : memref<64x32xf32, #tpu.memory_space<vmem>>, vector<8x32xf32>
    tpu.vector_store %arg6[%210, %c0_54], %207 {strides = array<i32>} : memref<64x32xf32, #tpu.memory_space<vmem>>, vector<8x32xf32>,
    %c8_i32_55 = arith.constant 8 : i32
    %c0_56 = arith.constant 0 : index
    %c0_57 = arith.constant 0 : index
    %212 = vector.load %arg8[%c0_56, %c0_57] : memref<8x32xf32, #tpu.memory_space<vmem>>, vector<8x32xf32>
    tpu.vector_store %arg8[%c0_56, %c0_57], %207 {strides = array<i32>} : memref<8x32xf32, #tpu.memory_space<vmem>>, vector<8x32xf32>,
    %c0_58 = arith.constant 0 : index
    %c0_59 = arith.constant 0 : index
    %213 = vector.load %arg9[%c0_58, %c0_59] : memref<8x32xf32, #tpu.memory_space<vmem>>, vector<8x32xf32>
    tpu.vector_store %arg9[%c0_58, %c0_59], %205 {strides = array<i32>} : memref<8x32xf32, #tpu.memory_space<vmem>>, vector<8x32xf32>,
    %c0_60 = arith.constant 0 : index
    %c0_61 = arith.constant 0 : index
    %214 = vector.load %arg6[%c0_60, %c0_61] : memref<64x32xf32, #tpu.memory_space<vmem>>, vector<64x32xf32>
    %c0_62 = arith.constant 0 : index
    %c0_63 = arith.constant 0 : index
    %215 = vector.load %arg4[%c0_62, %c0_63] : memref<32x64xf32, #tpu.memory_space<vmem>>, vector<32x64xf32>
    %cst_64 = arith.constant dense<0.000000e+00> : vector<64x64xf32>
    %216 = tpu.matmul %214, %215, %cst_64 {dimension_numbers = #tpu.dot_dimension_numbers<[1], [0], [0], [1], [0, 0, 1, 1], [], []>} : vector<64x32xf32>, vector<32x64xf32>, vector<64x64xf32> -> vector<64x64xf32>
    %c0_65 = arith.constant 0 : index
    %c0_66 = arith.constant 0 : index
    %217 = vector.load %arg5[%c0_65, %c0_66] : memref<1x64xf32, #tpu.memory_space<vmem>>, vector<1x64xf32>
    %218 = vector.broadcast %217 : vector<1x64xf32> to vector<64x64xf32>
    %219 = arith.addf %216, %218 : vector<64x64xf32>
    %c0_67 = arith.constant 0 : index
    %c0_68 = arith.constant 0 : index
    %220 = vector.load %arg7[%c0_67, %c0_68] : memref<64x64xf32, #tpu.memory_space<vmem>>, vector<64x64xf32>
    tpu.vector_store %arg7[%c0_67, %c0_68], %219 {strides = array<i32>} : memref<64x64xf32, #tpu.memory_space<vmem>>, vector<64x64xf32>,
    return
  }
}

</mosaic_0001>

<llo_original>
// kernel: text_generation_forward.1
$region0: #{text_generation_forward.1}
  #allocation0 [shape = 'u32[]', space=smem, size = 0x4, offset = 0x4, fixed_abs, tag = 'smem constant byte address 0x4 - core index']
  #allocation1 [shape = 'u32[144,128]{1,0:T(1,128)}', space=vmem, size = 0x12000, scoped, tag = 'internal scratch']
  %s0 = inlined_call_operand.vmem [shape: f32[8,8,128], index: 0, kind: input, shape index: {}]
  %s1 = inlined_call_operand.vmem [shape: f32[8,32], index: 1, kind: input, shape index: {}]
  %s2 = inlined_call_operand.vmem [shape: f32[8,32], index: 2, kind: input, shape index: {}]
  %s3 = inlined_call_operand.vmem [shape: f32[32,128], index: 3, kind: input, shape index: {}]
  %s4 = inlined_call_operand.vmem [shape: f32[32,64], index: 4, kind: input, shape index: {}]
  %s5 = inlined_call_operand.vmem [shape: f32[1,64], index: 5, kind: input, shape index: {}]
  %s6 = inlined_call_operand.hbm [shape: f32[64,32], index: 6, kind: output, shape index: {0}]
  %s7 = inlined_call_operand.hbm [shape: f32[64,64], index: 7, kind: output, shape index: {1}]
  %s8 = inlined_call_operand.hbm [shape: f32[8,32], index: 8, kind: output, shape index: {2}]
  %s9 = inlined_call_operand.hbm [shape: f32[8,32], index: 9, kind: output, shape index: {3}]
  %10 = xla_tuple %s6, %s7, %s8, %s9
  %s11 = sld [smem:[#allocation0]]
  $region58: #{text_generation_forward.1} parent=0
    _
  %s13 = ssub.s32 1, %s11
  %s14 = scalar_select 0, %s13, %s11
  $region1: #{text_generation_forward.1} parent=0
    #allocation2 [shape = 'u8[32768]{0}', space=vmem, size = 0x8000, scoped, tag = 'output window, operand 0, single buffered']
    #allocation3 [shape = 's32[1]{0}', space=sflag, size = 0x4, scoped, tag = 'scoped memory for text_generation_forward.1']
    #allocation4 [shape = 'u8[32768]{0}', space=vmem, size = 0x8000, scoped, tag = 'output window, operand 1, single buffered']
    #allocation5 [shape = 's32[1]{0}', space=sflag, size = 0x4, scoped, tag = 'scoped memory for text_generation_forward.1']
    #allocation6 [shape = 'u8[4096]{0}', space=vmem, size = 0x1000, scoped, tag = 'output window, operand 2, single buffered']
    #allocation7 [shape = 'u8[4096]{0}', space=vmem, size = 0x1000, scoped, tag = 'output window, operand 3, single buffered']
    #allocation8 [shape = 's32[1]{0}', space=sflag, size = 0x4, scoped, tag = 'scoped memory for text_generation_forward.1']
    %15 = vsyncpa [#allocation3], 0
    %16 = vsyncpa [#allocation5], 0
    %17 = vsyncpa [#allocation8], 0
    // Predicated region
    $region2: #{text_generation_forward.1} parent=1 // pred_check
      _
    $region3: #{text_generation_forward.1} parent=1 // pred_check_branch
      %19 = sbr.rel (0) target = $region5
    $region4: #{text_generation_forward.1} parent=1 // pred_region
      _
    $region5: #{text_generation_forward.1} parent=1 // pred_fallthru
      _
    // Predicated region
    $region6: #{text_generation_forward.1} parent=1 // pred_check
      _
    $region7: #{text_generation_forward.1} parent=1 // pred_check_branch
      %21 = sbr.rel (0) target = $region9
    $region8: #{text_generation_forward.1} parent=1 // pred_region
      _
    $region9: #{text_generation_forward.1} parent=1 // pred_fallthru
      _
    // Predicated region
    $region10: #{text_generation_forward.1} parent=1 // pred_check
      _
    $region11: #{text_generation_forward.1} parent=1 // pred_check_branch
      %23 = sbr.rel (0) target = $region13
    $region12: #{text_generation_forward.1} parent=1 // pred_region
      _
    $region13: #{text_generation_forward.1} parent=1 // pred_fallthru
      _
    // Predicated region
    $region14: #{text_generation_forward.1} parent=1 // pred_check
      _
    $region15: #{text_generation_forward.1} parent=1 // pred_check_branch
      %25 = sbr.rel (0) target = $region17
    $region16: #{text_generation_forward.1} parent=1 // pred_region
      _
    $region17: #{text_generation_forward.1} parent=1 // pred_fallthru
      _
    // Predicated region
    $region18: #{text_generation_forward.1} parent=1 // pred_check
      _
    $region19: #{text_generation_forward.1} parent=1 // pred_check_branch
      %27 = sbr.rel (0) target = $region21
    $region20: #{text_generation_forward.1} parent=1 // pred_region
      _
    $region21: #{text_generation_forward.1} parent=1 // pred_fallthru
      _
    // Predicated region
    $region22: #{text_generation_forward.1} parent=1 // pred_check
      _
    $region23: #{text_generation_forward.1} parent=1 // pred_check_branch
      %29 = sbr.rel (0) target = $region25
    $region24: #{text_generation_forward.1} parent=1 // pred_region
      _
    $region25: #{text_generation_forward.1} parent=1 // pred_fallthru
      _
    %v30 = vld [vmem:[%s3] sm:$0xff]
    %v31 = vld [vmem:[%s3 + $0x8] sm:$0xff]
    %v32 = vld [vmem:[%s3 + $0x10] sm:$0xff]
    %v33 = vld [vmem:[%s3 + $0x18] sm:$0xff]
    %v34 = vlaneseq
    %v35 = vand.u32 %v34, 127
    %vm36 = vcmp.lt.s32.totalorder %v35, 32
    %v37 = vsel %vm36, 2.0, 1.0
    %v38 = vsel %vm36, -1.0, 0.0
    %v39 = vld [vmem:[%s1] sm:$0xff]
    %v40 = vld [vmem:[%s2] sm:$0xff]
    %v41 = vld [vmem:[%s0] sm:$0xff]
    %vm42 = vcmask 261120
    %v44 = vsel %vm42, %v39, 0
    %46 = vmatprep.subr.mxu0 0.0
    %47 = vmatpush1.msra.mxu0 0.0
    %48 = vmatprep.subr.mxu0 0.0
    %49 = vmatpush1.msra.mxu0 0.0
    %50 = vmatprep.subr.mxu0 0.0
    %51 = vmatpush1.msra.mxu0 0.0
    %52 = vmatprep.subr.mxu0 0.0
    %53 = vmatpush1.msra.mxu0 0.0
    %54 = vmatprep.subr.mxu0 0.0
    %55 = vmatpush1.msra.mxu0 0.0
    %56 = vmatprep.subr.mxu0 0.0
    %57 = vmatpush1.msra.mxu0 0.0
    %58 = vmatprep.subr.mxu0 0.0
    %59 = vmatpush1.msra.mxu0 0.0
    %60 = vmatprep.subr.mxu0 0.0
    %61 = vmatpush1.msra.mxu0 0.0
    %62 = vmatprep.subr.mxu0 0.0
    %63 = vmatpush1.msra.mxu0 0.0
    %64 = vmatprep.subr.mxu0 0.0
    %65 = vmatpush1.msra.mxu0 0.0
    %66 = vmatprep.subr.mxu0 0.0
    %67 = vmatpush1.msra.mxu0 0.0
    %68 = vmatprep.subr.mxu0 0.0
    %69 = vmatpush1.msra.mxu0 0.0
    %70 = vmatprep.subr.mxu0 0.0
    %71 = vmatpush1.msra.mxu0 %v33
    %72 = vmatprep.subr.mxu0 0.0
    %73 = vmatpush1.msra.mxu0 %v32
    %74 = vmatprep.subr.mxu0 0.0
    %75 = vmatpush1.msra.mxu0 %v31
    %76 = vmatprep.subr.mxu0 0.0
    %77 = vmatpush1.msra.mxu0 %v30
    %78 = vmatprep.subr.mxu0 0.0
    %79 = vmatpush2.msra.mxu0 0.0
    %80 = vmatprep.subr.mxu0 0.0
    %81 = vmatpush2.msra.mxu0 0.0
    %82 = vmatprep.subr.mxu0 0.0
    %83 = vmatpush2.msra.mxu0 0.0
    %84 = vmatprep.subr.mxu0 0.0
    %85 = vmatpush2.msra.mxu0 0.0
    %86 = vmatprep.subr.mxu0 0.0
    %87 = vmatpush2.msra.mxu0 0.0
    %88 = vmatprep.subr.mxu0 0.0
    %89 = vmatpush2.msra.mxu0 0.0
    %90 = vmatprep.subr.mxu0 0.0
    %91 = vmatpush2.msra.mxu0 0.0
    %92 = vmatprep.subr.mxu0 0.0
    %93 = vmatpush2.msra.mxu0 0.0
    %94 = vmatprep.subr.mxu0 0.0
    %95 = vmatpush2.msra.mxu0 0.0
    %96 = vmatprep.subr.mxu0 0.0
    %97 = vmatpush2.msra.mxu0 0.0
    %98 = vmatprep.subr.mxu0 0.0
    %99 = vmatpush2.msra.mxu0 0.0
    %100 = vmatprep.subr.mxu0 0.0
    %101 = vmatpush2.msra.mxu0 0.0
    %102 = vmatprep.subr.mxu0 0.0
    %103 = vmatpush2.msra.mxu0 0.0
    %104 = vmatprep.subr.mxu0 0.0
    %105 = vmatpush2.msra.mxu0 0.0
    %106 = vmatprep.subr.mxu0 0.0
    %107 = vmatpush2.msra.mxu0 0.0
    %108 = vmatprep.subr.mxu0 0.0
    %109 = vmatpush2.msra.mxu0 0.0
    %110 = vmatprep.mubr.f32.mxu0 0.0
    %111 = vmatmul.mubr.f32.gmra.mxu0 %v44
    %v112 = vpop.f32.mrf.mxu0
    %v113 = vadd.f32 0.0, %v112
    %v114 = vpop.f32.mrf.mxu0
    %115 = vdwg.mxu0
    %v116 = vadd.f32 %v41, %v113
    %v117 = vxor.u32 %v116, 2147483648
    %v118 = vmul.f32 %v117, 1.442695
    %v119 = vpow.pop %v118
    %v120 = vadd.f32 %v119, 1.0
    %v121 = vrcp.pop %v120
    %v122 = vmul.f32 1.0, %v121
    %v123 = vmul.f32 %v122, %v37
    %v124 = vadd.f32 %v123, %v38
    %126 = vrot.lane.b32.xlu0 %v124, 96
    %v127 = vpop.permute.xlu0 %126
    %v129 = vmul.f32 %v124, %v127
    %130 = vrot.lane.b32.xlu0 %v124, 64
    %v131 = vpop.permute.xlu0 %130
    %v133 = vmul.f32 %v40, %v131
    %v134 = vadd.f32 %v129, %v133
    %v135 = vtanh.pop %v134
    %136 = vrot.lane.b32.xlu0 %v124, 32
    %v137 = vpop.permute.xlu0 %136
    %v139 = vmul.f32 %v135, %v137
    %140 = vst.msk [vmem:[#allocation2] sm:$0xff] %vm42, %v139
    %s141 = scalar_lea.vmem %s0, 8
    %v142 = vld [vmem:[%s141] sm:$0xff]
    %v144 = vsel %vm42, %v139, 0
    %146 = vmatprep.subr.mxu0 0.0
    %147 = vmatpush1.msra.mxu0 0.0
    %148 = vmatprep.subr.mxu0 0.0
    %149 = vmatpush1.msra.mxu0 0.0
    %150 = vmatprep.subr.mxu0 0.0
    %151 = vmatpush1.msra.mxu0 0.0
    %152 = vmatprep.subr.mxu0 0.0
    %153 = vmatpush1.msra.mxu0 0.0
    %154 = vmatprep.subr.mxu0 0.0
    %155 = vmatpush1.msra.mxu0 0.0
    %156 = vmatprep.subr.mxu0 0.0
    %157 = vmatpush1.msra.mxu0 0.0
    %158 = vmatprep.subr.mxu0 0.0
    %159 = vmatpush1.msra.mxu0 0.0
    %160 = vmatprep.subr.mxu0 0.0
    %161 = vmatpush1.msra.mxu0 0.0
    %162 = vmatprep.subr.mxu0 0.0
    %163 = vmatpush1.msra.mxu0 0.0
    %164 = vmatprep.subr.mxu0 0.0
    %165 = vmatpush1.msra.mxu0 0.0
    %166 = vmatprep.subr.mxu0 0.0
    %167 = vmatpush1.msra.mxu0 0.0
    %168 = vmatprep.subr.mxu0 0.0
    %169 = vmatpush1.msra.mxu0 0.0
    %170 = vmatprep.subr.mxu0 0.0
    %171 = vmatpush1.msra.mxu0 %v33
    %172 = vmatprep.subr.mxu0 0.0
    %173 = vmatpush1.msra.mxu0 %v32
    %174 = vmatprep.subr.mxu0 0.0
    %175 = vmatpush1.msra.mxu0 %v31
    %176 = vmatprep.subr.mxu0 0.0
    %177 = vmatpush1.msra.mxu0 %v30
    %178 = vmatprep.subr.mxu0 0.0
    %179 = vmatpush2.msra.mxu0 0.0
    %180 = vmatprep.subr.mxu0 0.0
    %181 = vmatpush2.msra.mxu0 0.0
    %182 = vmatprep.subr.mxu0 0.0
    %183 = vmatpush2.msra.mxu0 0.0
    %184 = vmatprep.subr.mxu0 0.0
    %185 = vmatpush2.msra.mxu0 0.0
    %186 = vmatprep.subr.mxu0 0.0
    %187 = vmatpush2.msra.mxu0 0.0
    %188 = vmatprep.subr.mxu0 0.0
    %189 = vmatpush2.msra.mxu0 0.0
    %190 = vmatprep.subr.mxu0 0.0
    %191 = vmatpush2.msra.mxu0 0.0
    %192 = vmatprep.subr.mxu0 0.0
    %193 = vmatpush2.msra.mxu0 0.0
    %194 = vmatprep.subr.mxu0 0.0
    %195 = vmatpush2.msra.mxu0 0.0
    %196 = vmatprep.subr.mxu0 0.0
    %197 = vmatpush2.msra.mxu0 0.0
    %198 = vmatprep.subr.mxu0 0.0
    %199 = vmatpush2.msra.mxu0 0.0
    %200 = vmatprep.subr.mxu0 0.0
    %201 = vmatpush2.msra.mxu0 0.0
    %202 = vmatprep.subr.mxu0 0.0
    %203 = vmatpush2.msra.mxu0 0.0
    %204 = vmatprep.subr.mxu0 0.0
    %205 = vmatpush2.msra.mxu0 0.0
    %206 = vmatprep.subr.mxu0 0.0
    %207 = vmatpush2.msra.mxu0 0.0
    %208 = vmatprep.subr.mxu0 0.0
    %209 = vmatpush2.msra.mxu0 0.0
    %210 = vmatprep.mubr.f32.mxu0 0.0
    %211 = vmatmul.mubr.f32.gmra.mxu0 %v144
    %v212 = vpop.f32.mrf.mxu0
    %v213 = vadd.f32 0.0, %v212
    %v214 = vpop.f32.mrf.mxu0
    %215 = vdwg.mxu0
    %v216 = vadd.f32 %v142, %v213
    %v217 = vxor.u32 %v216, 2147483648
    %v218 = vmul.f32 %v217, 1.442695
    %v219 = vpow.pop %v218
    %v220 = vadd.f32 %v219, 1.0
    %v221 = vrcp.pop %v220
    %v222 = vmul.f32 1.0, %v221
    %v223 = vmul.f32 %v222, %v37
    %v224 = vadd.f32 %v223, %v38
    %226 = vrot.lane.b32.xlu0 %v224, 96
    %v227 = vpop.permute.xlu0 %226
    %v229 = vmul.f32 %v224, %v227
    %230 = vrot.lane.b32.xlu0 %v224, 64
    %v231 = vpop.permute.xlu0 %230
    %v233 = vmul.f32 %v134, %v231
    %v234 = vadd.f32 %v229, %v233
    %v235 = vtanh.pop %v234
    %236 = vrot.lane.b32.xlu0 %v224, 32
    %v237 = vpop.permute.xlu0 %236
    %v239 = vmul.f32 %v235, %v237
    %s240 = scalar_lea.vmem [#allocation2], 8
    %241 = vst.msk [vmem:[%s240] sm:$0xff] %vm42, %v239
    %s242 = scalar_lea.vmem %s0, 16
    %v243 = vld [vmem:[%s242] sm:$0xff]
    %v245 = vsel %vm42, %v239, 0
    %247 = vmatprep.subr.mxu0 0.0
    %248 = vmatpush1.msra.mxu0 0.0
    %249 = vmatprep.subr.mxu0 0.0
    %250 = vmatpush1.msra.mxu0 0.0
    %251 = vmatprep.subr.mxu0 0.0
    %252 = vmatpush1.msra.mxu0 0.0
    %253 = vmatprep.subr.mxu0 0.0
    %254 = vmatpush1.msra.mxu0 0.0
    %255 = vmatprep.subr.mxu0 0.0
    %256 = vmatpush1.msra.mxu0 0.0
    %257 = vmatprep.subr.mxu0 0.0
    %258 = vmatpush1.msra.mxu0 0.0
    %259 = vmatprep.subr.mxu0 0.0
    %260 = vmatpush1.msra.mxu0 0.0
    %261 = vmatprep.subr.mxu0 0.0
    %262 = vmatpush1.msra.mxu0 0.0
    %263 = vmatprep.subr.mxu0 0.0
    %264 = vmatpush1.msra.mxu0 0.0
    %265 = vmatprep.subr.mxu0 0.0
    %266 = vmatpush1.msra.mxu0 0.0
    %267 = vmatprep.subr.mxu0 0.0
    %268 = vmatpush1.msra.mxu0 0.0
    %269 = vmatprep.subr.mxu0 0.0
    %270 = vmatpush1.msra.mxu0 0.0
    %271 = vmatprep.subr.mxu0 0.0
    %272 = vmatpush1.msra.mxu0 %v33
    %273 = vmatprep.subr.mxu0 0.0
    %274 = vmatpush1.msra.mxu0 %v32
    %275 = vmatprep.subr.mxu0 0.0
    %276 = vmatpush1.msra.mxu0 %v31
    %277 = vmatprep.subr.mxu0 0.0
    %278 = vmatpush1.msra.mxu0 %v30
    %279 = vmatprep.subr.mxu0 0.0
    %280 = vmatpush2.msra.mxu0 0.0
    %281 = vmatprep.subr.mxu0 0.0
    %282 = vmatpush2.msra.mxu0 0.0
    %283 = vmatprep.subr.mxu0 0.0
    %284 = vmatpush2.msra.mxu0 0.0
    %285 = vmatprep.subr.mxu0 0.0
    %286 = vmatpush2.msra.mxu0 0.0
    %287 = vmatprep.subr.mxu0 0.0
    %288 = vmatpush2.msra.mxu0 0.0
    %289 = vmatprep.subr.mxu0 0.0
    %290 = vmatpush2.msra.mxu0 0.0
    %291 = vmatprep.subr.mxu0 0.0
    %292 = vmatpush2.msra.mxu0 0.0
    %293 = vmatprep.subr.mxu0 0.0
    %294 = vmatpush2.msra.mxu0 0.0
    %295 = vmatprep.subr.mxu0 0.0
    %296 = vmatpush2.msra.mxu0 0.0
    %297 = vmatprep.subr.mxu0 0.0
    %298 = vmatpush2.msra.mxu0 0.0
    %299 = vmatprep.subr.mxu0 0.0
    %300 = vmatpush2.msra.mxu0 0.0
    %301 = vmatprep.subr.mxu0 0.0
    %302 = vmatpush2.msra.mxu0 0.0
    %303 = vmatprep.subr.mxu0 0.0
    %304 = vmatpush2.msra.mxu0 0.0
    %305 = vmatprep.subr.mxu0 0.0
    %306 = vmatpush2.msra.mxu0 0.0
    %307 = vmatprep.subr.mxu0 0.0
    %308 = vmatpush2.msra.mxu0 0.0
    %309 = vmatprep.subr.mxu0 0.0
    %310 = vmatpush2.msra.mxu0 0.0
    %311 = vmatprep.mubr.f32.mxu0 0.0
    %312 = vmatmul.mubr.f32.gmra.mxu0 %v245
    %v313 = vpop.f32.mrf.mxu0
    %v314 = vadd.f32 0.0, %v313
    %v315 = vpop.f32.mrf.mxu0
    %316 = vdwg.mxu0
    %v317 = vadd.f32 %v243, %v314
    %v318 = vxor.u32 %v317, 2147483648
    %v319 = vmul.f32 %v318, 1.442695
    %v320 = vpow.pop %v319
    %v321 = vadd.f32 %v320, 1.0
    %v322 = vrcp.pop %v321
    %v323 = vmul.f32 1.0, %v322
    %v324 = vmul.f32 %v323, %v37
    %v325 = vadd.f32 %v324, %v38
    %327 = vrot.lane.b32.xlu0 %v325, 96
    %v328 = vpop.permute.xlu0 %327
    %v330 = vmul.f32 %v325, %v328
    %331 = vrot.lane.b32.xlu0 %v325, 64
    %v332 = vpop.permute.xlu0 %331
    %v334 = vmul.f32 %v234, %v332
    %v335 = vadd.f32 %v330, %v334
    %v336 = vtanh.pop %v335
    %337 = vrot.lane.b32.xlu0 %v325, 32
    %v338 = vpop.permute.xlu0 %337
    %v340 = vmul.f32 %v336, %v338
    %s341 = scalar_lea.vmem [#allocation2], 16
    %342 = vst.msk [vmem:[%s341] sm:$0xff] %vm42, %v340
    %s343 = scalar_lea.vmem %s0, 24
    %v344 = vld [vmem:[%s343] sm:$0xff]
    %v346 = vsel %vm42, %v340, 0
    %348 = vmatprep.subr.mxu0 0.0
    %349 = vmatpush1.msra.mxu0 0.0
    %350 = vmatprep.subr.mxu0 0.0
    %351 = vmatpush1.msra.mxu0 0.0
    %352 = vmatprep.subr.mxu0 0.0
    %353 = vmatpush1.msra.mxu0 0.0
    %354 = vmatprep.subr.mxu0 0.0
    %355 = vmatpush1.msra.mxu0 0.0
    %356 = vmatprep.subr.mxu0 0.0
    %357 = vmatpush1.msra.mxu0 0.0
    %358 = vmatprep.subr.mxu0 0.0
    %359 = vmatpush1.msra.mxu0 0.0
    %360 = vmatprep.subr.mxu0 0.0
    %361 = vmatpush1.msra.mxu0 0.0
    %362 = vmatprep.subr.mxu0 0.0
    %363 = vmatpush1.msra.mxu0 0.0
    %364 = vmatprep.subr.mxu0 0.0
    %365 = vmatpush1.msra.mxu0 0.0
    %366 = vmatprep.subr.mxu0 0.0
    %367 = vmatpush1.msra.mxu0 0.0
    %368 = vmatprep.subr.mxu0 0.0
    %369 = vmatpush1.msra.mxu0 0.0
    %370 = vmatprep.subr.mxu0 0.0
    %371 = vmatpush1.msra.mxu0 0.0
    %372 = vmatprep.subr.mxu0 0.0
    %373 = vmatpush1.msra.mxu0 %v33
    %374 = vmatprep.subr.mxu0 0.0
    %375 = vmatpush1.msra.mxu0 %v32
    %376 = vmatprep.subr.mxu0 0.0
    %377 = vmatpush1.msra.mxu0 %v31
    %378 = vmatprep.subr.mxu0 0.0
    %379 = vmatpush1.msra.mxu0 %v30
    %380 = vmatprep.subr.mxu0 0.0
    %381 = vmatpush2.msra.mxu0 0.0
    %382 = vmatprep.subr.mxu0 0.0
    %383 = vmatpush2.msra.mxu0 0.0
    %384 = vmatprep.subr.mxu0 0.0
    %385 = vmatpush2.msra.mxu0 0.0
    %386 = vmatprep.subr.mxu0 0.0
    %387 = vmatpush2.msra.mxu0 0.0
    %388 = vmatprep.subr.mxu0 0.0
    %389 = vmatpush2.msra.mxu0 0.0
    %390 = vmatprep.subr.mxu0 0.0
    %391 = vmatpush2.msra.mxu0 0.0
    %392 = vmatprep.subr.mxu0 0.0
    %393 = vmatpush2.msra.mxu0 0.0
    %394 = vmatprep.subr.mxu0 0.0
    %395 = vmatpush2.msra.mxu0 0.0
    %396 = vmatprep.subr.mxu0 0.0
    %397 = vmatpush2.msra.mxu0 0.0
    %398 = vmatprep.subr.mxu0 0.0
    %399 = vmatpush2.msra.mxu0 0.0
    %400 = vmatprep.subr.mxu0 0.0
    %401 = vmatpush2.msra.mxu0 0.0
    %402 = vmatprep.subr.mxu0 0.0
    %403 = vmatpush2.msra.mxu0 0.0
    %404 = vmatprep.subr.mxu0 0.0
    %405 = vmatpush2.msra.mxu0 0.0
    %406 = vmatprep.subr.mxu0 0.0
    %407 = vmatpush2.msra.mxu0 0.0
    %408 = vmatprep.subr.mxu0 0.0
    %409 = vmatpush2.msra.mxu0 0.0
    %410 = vmatprep.subr.mxu0 0.0
    %411 = vmatpush2.msra.mxu0 0.0
    %412 = vmatprep.mubr.f32.mxu0 0.0
    %413 = vmatmul.mubr.f32.gmra.mxu0 %v346
    %v414 = vpop.f32.mrf.mxu0
    %v415 = vadd.f32 0.0, %v414
    %v416 = vpop.f32.mrf.mxu0
    %417 = vdwg.mxu0
    %v418 = vadd.f32 %v344, %v415
    %v419 = vxor.u32 %v418, 2147483648
    %v420 = vmul.f32 %v419, 1.442695
    %v421 = vpow.pop %v420
    %v422 = vadd.f32 %v421, 1.0
    %v423 = vrcp.pop %v422
    %v424 = vmul.f32 1.0, %v423
    %v425 = vmul.f32 %v424, %v37
    %v426 = vadd.f32 %v425, %v38
    %428 = vrot.lane.b32.xlu0 %v426, 96
    %v429 = vpop.permute.xlu0 %428
    %v431 = vmul.f32 %v426, %v429
    %432 = vrot.lane.b32.xlu0 %v426, 64
    %v433 = vpop.permute.xlu0 %432
    %v435 = vmul.f32 %v335, %v433
    %v436 = vadd.f32 %v431, %v435
    %v437 = vtanh.pop %v436
    %438 = vrot.lane.b32.xlu0 %v426, 32
    %v439 = vpop.permute.xlu0 %438
    %v441 = vmul.f32 %v437, %v439
    %s442 = scalar_lea.vmem [#allocation2], 24
    %443 = vst.msk [vmem:[%s442] sm:$0xff] %vm42, %v441
    %s444 = scalar_lea.vmem %s0, 32
    %v445 = vld [vmem:[%s444] sm:$0xff]
    %v447 = vsel %vm42, %v441, 0
    %449 = vmatprep.subr.mxu0 0.0
    %450 = vmatpush1.msra.mxu0 0.0
    %451 = vmatprep.subr.mxu0 0.0
    %452 = vmatpush1.msra.mxu0 0.0
    %453 = vmatprep.subr.mxu0 0.0
    %454 = vmatpush1.msra.mxu0 0.0
    %455 = vmatprep.subr.mxu0 0.0
    %456 = vmatpush1.msra.mxu0 0.0
    %457 = vmatprep.subr.mxu0 0.0
    %458 = vmatpush1.msra.mxu0 0.0
    %459 = vmatprep.subr.mxu0 0.0
    %460 = vmatpush1.msra.mxu0 0.0
    %461 = vmatprep.subr.mxu0 0.0
    %462 = vmatpush1.msra.mxu0 0.0
    %463 = vmatprep.subr.mxu0 0.0
    %464 = vmatpush1.msra.mxu0 0.0
    %465 = vmatprep.subr.mxu0 0.0
    %466 = vmatpush1.msra.mxu0 0.0
    %467 = vmatprep.subr.mxu0 0.0
    %468 = vmatpush1.msra.mxu0 0.0
    %469 = vmatprep.subr.mxu0 0.0
    %470 = vmatpush1.msra.mxu0 0.0
    %471 = vmatprep.subr.mxu0 0.0
    %472 = vmatpush1.msra.mxu0 0.0
    %473 = vmatprep.subr.mxu0 0.0
    %474 = vmatpush1.msra.mxu0 %v33
    %475 = vmatprep.subr.mxu0 0.0
    %476 = vmatpush1.msra.mxu0 %v32
    %477 = vmatprep.subr.mxu0 0.0
    %478 = vmatpush1.msra.mxu0 %v31
    %479 = vmatprep.subr.mxu0 0.0
    %480 = vmatpush1.msra.mxu0 %v30
    %481 = vmatprep.subr.mxu0 0.0
    %482 = vmatpush2.msra.mxu0 0.0
    %483 = vmatprep.subr.mxu0 0.0
    %484 = vmatpush2.msra.mxu0 0.0
    %485 = vmatprep.subr.mxu0 0.0
    %486 = vmatpush2.msra.mxu0 0.0
    %487 = vmatprep.subr.mxu0 0.0
    %488 = vmatpush2.msra.mxu0 0.0
    %489 = vmatprep.subr.mxu0 0.0
    %490 = vmatpush2.msra.mxu0 0.0
    %491 = vmatprep.subr.mxu0 0.0
    %492 = vmatpush2.msra.mxu0 0.0
    %493 = vmatprep.subr.mxu0 0.0
    %494 = vmatpush2.msra.mxu0 0.0
    %495 = vmatprep.subr.mxu0 0.0
    %496 = vmatpush2.msra.mxu0 0.0
    %497 = vmatprep.subr.mxu0 0.0
    %498 = vmatpush2.msra.mxu0 0.0
    %499 = vmatprep.subr.mxu0 0.0
    %500 = vmatpush2.msra.mxu0 0.0
    %501 = vmatprep.subr.mxu0 0.0
    %502 = vmatpush2.msra.mxu0 0.0
    %503 = vmatprep.subr.mxu0 0.0
    %504 = vmatpush2.msra.mxu0 0.0
    %505 = vmatprep.subr.mxu0 0.0
    %506 = vmatpush2.msra.mxu0 0.0
    %507 = vmatprep.subr.mxu0 0.0
    %508 = vmatpush2.msra.mxu0 0.0
    %509 = vmatprep.subr.mxu0 0.0
    %510 = vmatpush2.msra.mxu0 0.0
    %511 = vmatprep.subr.mxu0 0.0
    %512 = vmatpush2.msra.mxu0 0.0
    %513 = vmatprep.mubr.f32.mxu0 0.0
    %514 = vmatmul.mubr.f32.gmra.mxu0 %v447
    %v515 = vpop.f32.mrf.mxu0
    %v516 = vadd.f32 0.0, %v515
    %v517 = vpop.f32.mrf.mxu0
    %518 = vdwg.mxu0
    %v519 = vadd.f32 %v445, %v516
    %v520 = vxor.u32 %v519, 2147483648
    %v521 = vmul.f32 %v520, 1.442695
    %v522 = vpow.pop %v521
    %v523 = vadd.f32 %v522, 1.0
    %v524 = vrcp.pop %v523
    %v525 = vmul.f32 1.0, %v524
    %v526 = vmul.f32 %v525, %v37
    %v527 = vadd.f32 %v526, %v38
    %529 = vrot.lane.b32.xlu0 %v527, 96
    %v530 = vpop.permute.xlu0 %529
    %v532 = vmul.f32 %v527, %v530
    %533 = vrot.lane.b32.xlu0 %v527, 64
    %v534 = vpop.permute.xlu0 %533
    %v536 = vmul.f32 %v436, %v534
    %v537 = vadd.f32 %v532, %v536
    %v538 = vtanh.pop %v537
    %539 = vrot.lane.b32.xlu0 %v527, 32
    %v540 = vpop.permute.xlu0 %539
    %v542 = vmul.f32 %v538, %v540
    %s543 = scalar_lea.vmem [#allocation2], 32
    %544 = vst.msk [vmem:[%s543] sm:$0xff] %vm42, %v542
    %s545 = scalar_lea.vmem %s0, 40
    %v546 = vld [vmem:[%s545] sm:$0xff]
    %v548 = vsel %vm42, %v542, 0
    %550 = vmatprep.subr.mxu0 0.0
    %551 = vmatpush1.msra.mxu0 0.0
    %552 = vmatprep.subr.mxu0 0.0
    %553 = vmatpush1.msra.mxu0 0.0
    %554 = vmatprep.subr.mxu0 0.0
    %555 = vmatpush1.msra.mxu0 0.0
    %556 = vmatprep.subr.mxu0 0.0
    %557 = vmatpush1.msra.mxu0 0.0
    %558 = vmatprep.subr.mxu0 0.0
    %559 = vmatpush1.msra.mxu0 0.0
    %560 = vmatprep.subr.mxu0 0.0
    %561 = vmatpush1.msra.mxu0 0.0
    %562 = vmatprep.subr.mxu0 0.0
    %563 = vmatpush1.msra.mxu0 0.0
    %564 = vmatprep.subr.mxu0 0.0
    %565 = vmatpush1.msra.mxu0 0.0
    %566 = vmatprep.subr.mxu0 0.0
    %567 = vmatpush1.msra.mxu0 0.0
    %568 = vmatprep.subr.mxu0 0.0
    %569 = vmatpush1.msra.mxu0 0.0
    %570 = vmatprep.subr.mxu0 0.0
    %571 = vmatpush1.msra.mxu0 0.0
    %572 = vmatprep.subr.mxu0 0.0
    %573 = vmatpush1.msra.mxu0 0.0
    %574 = vmatprep.subr.mxu0 0.0
    %575 = vmatpush1.msra.mxu0 %v33
    %576 = vmatprep.subr.mxu0 0.0
    %577 = vmatpush1.msra.mxu0 %v32
    %578 = vmatprep.subr.mxu0 0.0
    %579 = vmatpush1.msra.mxu0 %v31
    %580 = vmatprep.subr.mxu0 0.0
    %581 = vmatpush1.msra.mxu0 %v30
    %582 = vmatprep.subr.mxu0 0.0
    %583 = vmatpush2.msra.mxu0 0.0
    %584 = vmatprep.subr.mxu0 0.0
    %585 = vmatpush2.msra.mxu0 0.0
    %586 = vmatprep.subr.mxu0 0.0
    %587 = vmatpush2.msra.mxu0 0.0
    %588 = vmatprep.subr.mxu0 0.0
    %589 = vmatpush2.msra.mxu0 0.0
    %590 = vmatprep.subr.mxu0 0.0
    %591 = vmatpush2.msra.mxu0 0.0
    %592 = vmatprep.subr.mxu0 0.0
    %593 = vmatpush2.msra.mxu0 0.0
    %594 = vmatprep.subr.mxu0 0.0
    %595 = vmatpush2.msra.mxu0 0.0
    %596 = vmatprep.subr.mxu0 0.0
    %597 = vmatpush2.msra.mxu0 0.0
    %598 = vmatprep.subr.mxu0 0.0
    %599 = vmatpush2.msra.mxu0 0.0
    %600 = vmatprep.subr.mxu0 0.0
    %601 = vmatpush2.msra.mxu0 0.0
    %602 = vmatprep.subr.mxu0 0.0
    %603 = vmatpush2.msra.mxu0 0.0
    %604 = vmatprep.subr.mxu0 0.0
    %605 = vmatpush2.msra.mxu0 0.0
    %606 = vmatprep.subr.mxu0 0.0
    %607 = vmatpush2.msra.mxu0 0.0
    %608 = vmatprep.subr.mxu0 0.0
    %609 = vmatpush2.msra.mxu0 0.0
    %610 = vmatprep.subr.mxu0 0.0
    %611 = vmatpush2.msra.mxu0 0.0
    %612 = vmatprep.subr.mxu0 0.0
    %613 = vmatpush2.msra.mxu0 0.0
    %614 = vmatprep.mubr.f32.mxu0 0.0
    %615 = vmatmul.mubr.f32.gmra.mxu0 %v548
    %v616 = vpop.f32.mrf.mxu0
    %v617 = vadd.f32 0.0, %v616
    %v618 = vpop.f32.mrf.mxu0
    %619 = vdwg.mxu0
    %v620 = vadd.f32 %v546, %v617
    %v621 = vxor.u32 %v620, 2147483648
    %v622 = vmul.f32 %v621, 1.442695
    %v623 = vpow.pop %v622
    %v624 = vadd.f32 %v623, 1.0
    %v625 = vrcp.pop %v624
    %v626 = vmul.f32 1.0, %v625
    %v627 = vmul.f32 %v626, %v37
    %v628 = vadd.f32 %v627, %v38
    %630 = vrot.lane.b32.xlu0 %v628, 96
    %v631 = vpop.permute.xlu0 %630
    %v633 = vmul.f32 %v628, %v631
    %634 = vrot.lane.b32.xlu0 %v628, 64
    %v635 = vpop.permute.xlu0 %634
    %v637 = vmul.f32 %v537, %v635
    %v638 = vadd.f32 %v633, %v637
    %v639 = vtanh.pop %v638
    %640 = vrot.lane.b32.xlu0 %v628, 32
    %v641 = vpop.permute.xlu0 %640
    %v643 = vmul.f32 %v639, %v641
    %s644 = scalar_lea.vmem [#allocation2], 40
    %645 = vst.msk [vmem:[%s644] sm:$0xff] %vm42, %v643
    %s646 = scalar_lea.vmem %s0, 48
    %v647 = vld [vmem:[%s646] sm:$0xff]
    %v649 = vsel %vm42, %v643, 0
    %651 = vmatprep.subr.mxu0 0.0
    %652 = vmatpush1.msra.mxu0 0.0
    %653 = vmatprep.subr.mxu0 0.0
    %654 = vmatpush1.msra.mxu0 0.0
    %655 = vmatprep.subr.mxu0 0.0
    %656 = vmatpush1.msra.mxu0 0.0
    %657 = vmatprep.subr.mxu0 0.0
    %658 = vmatpush1.msra.mxu0 0.0
    %659 = vmatprep.subr.mxu0 0.0
    %660 = vmatpush1.msra.mxu0 0.0
    %661 = vmatprep.subr.mxu0 0.0
    %662 = vmatpush1.msra.mxu0 0.0
    %663 = vmatprep.subr.mxu0 0.0
    %664 = vmatpush1.msra.mxu0 0.0
    %665 = vmatprep.subr.mxu0 0.0
    %666 = vmatpush1.msra.mxu0 0.0
    %667 = vmatprep.subr.mxu0 0.0
    %668 = vmatpush1.msra.mxu0 0.0
    %669 = vmatprep.subr.mxu0 0.0
    %670 = vmatpush1.msra.mxu0 0.0
    %671 = vmatprep.subr.mxu0 0.0
    %672 = vmatpush1.msra.mxu0 0.0
    %673 = vmatprep.subr.mxu0 0.0
    %674 = vmatpush1.msra.mxu0 0.0
    %675 = vmatprep.subr.mxu0 0.0
    %676 = vmatpush1.msra.mxu0 %v33
    %677 = vmatprep.subr.mxu0 0.0
    %678 = vmatpush1.msra.mxu0 %v32
    %679 = vmatprep.subr.mxu0 0.0
    %680 = vmatpush1.msra.mxu0 %v31
    %681 = vmatprep.subr.mxu0 0.0
    %682 = vmatpush1.msra.mxu0 %v30
    %683 = vmatprep.subr.mxu0 0.0
    %684 = vmatpush2.msra.mxu0 0.0
    %685 = vmatprep.subr.mxu0 0.0
    %686 = vmatpush2.msra.mxu0 0.0
    %687 = vmatprep.subr.mxu0 0.0
    %688 = vmatpush2.msra.mxu0 0.0
    %689 = vmatprep.subr.mxu0 0.0
    %690 = vmatpush2.msra.mxu0 0.0
    %691 = vmatprep.subr.mxu0 0.0
    %692 = vmatpush2.msra.mxu0 0.0
    %693 = vmatprep.subr.mxu0 0.0
    %694 = vmatpush2.msra.mxu0 0.0
    %695 = vmatprep.subr.mxu0 0.0
    %696 = vmatpush2.msra.mxu0 0.0
    %697 = vmatprep.subr.mxu0 0.0
    %698 = vmatpush2.msra.mxu0 0.0
    %699 = vmatprep.subr.mxu0 0.0
    %700 = vmatpush2.msra.mxu0 0.0
    %701 = vmatprep.subr.mxu0 0.0
    %702 = vmatpush2.msra.mxu0 0.0
    %703 = vmatprep.subr.mxu0 0.0
    %704 = vmatpush2.msra.mxu0 0.0
    %705 = vmatprep.subr.mxu0 0.0
    %706 = vmatpush2.msra.mxu0 0.0
    %707 = vmatprep.subr.mxu0 0.0
    %708 = vmatpush2.msra.mxu0 0.0
    %709 = vmatprep.subr.mxu0 0.0
    %710 = vmatpush2.msra.mxu0 0.0
    %711 = vmatprep.subr.mxu0 0.0
    %712 = vmatpush2.msra.mxu0 0.0
    %713 = vmatprep.subr.mxu0 0.0
    %714 = vmatpush2.msra.mxu0 0.0
    %715 = vmatprep.mubr.f32.mxu0 0.0
    %716 = vmatmul.mubr.f32.gmra.mxu0 %v649
    %v717 = vpop.f32.mrf.mxu0
    %v718 = vadd.f32 0.0, %v717
    %v719 = vpop.f32.mrf.mxu0
    %720 = vdwg.mxu0
    %v721 = vadd.f32 %v647, %v718
    %v722 = vxor.u32 %v721, 2147483648
    %v723 = vmul.f32 %v722, 1.442695
    %v724 = vpow.pop %v723
    %v725 = vadd.f32 %v724, 1.0
    %v726 = vrcp.pop %v725
    %v727 = vmul.f32 1.0, %v726
    %v728 = vmul.f32 %v727, %v37
    %v729 = vadd.f32 %v728, %v38
    %731 = vrot.lane.b32.xlu0 %v729, 96
    %v732 = vpop.permute.xlu0 %731
    %v734 = vmul.f32 %v729, %v732
    %735 = vrot.lane.b32.xlu0 %v729, 64
    %v736 = vpop.permute.xlu0 %735
    %v738 = vmul.f32 %v638, %v736
    %v739 = vadd.f32 %v734, %v738
    %v740 = vtanh.pop %v739
    %741 = vrot.lane.b32.xlu0 %v729, 32
    %v742 = vpop.permute.xlu0 %741
    %v744 = vmul.f32 %v740, %v742
    %s745 = scalar_lea.vmem [#allocation2], 48
    %746 = vst.msk [vmem:[%s745] sm:$0xff] %vm42, %v744
    %s747 = scalar_lea.vmem %s0, 56
    %v748 = vld [vmem:[%s747] sm:$0xff]
    %v750 = vsel %vm42, %v744, 0
    %752 = vmatprep.subr.mxu0 0.0
    %753 = vmatpush1.msra.mxu0 0.0
    %754 = vmatprep.subr.mxu0 0.0
    %755 = vmatpush1.msra.mxu0 0.0
    %756 = vmatprep.subr.mxu0 0.0
    %757 = vmatpush1.msra.mxu0 0.0
    %758 = vmatprep.subr.mxu0 0.0
    %759 = vmatpush1.msra.mxu0 0.0
    %760 = vmatprep.subr.mxu0 0.0
    %761 = vmatpush1.msra.mxu0 0.0
    %762 = vmatprep.subr.mxu0 0.0
    %763 = vmatpush1.msra.mxu0 0.0
    %764 = vmatprep.subr.mxu0 0.0
    %765 = vmatpush1.msra.mxu0 0.0
    %766 = vmatprep.subr.mxu0 0.0
    %767 = vmatpush1.msra.mxu0 0.0
    %768 = vmatprep.subr.mxu0 0.0
    %769 = vmatpush1.msra.mxu0 0.0
    %770 = vmatprep.subr.mxu0 0.0
    %771 = vmatpush1.msra.mxu0 0.0
    %772 = vmatprep.subr.mxu0 0.0
    %773 = vmatpush1.msra.mxu0 0.0
    %774 = vmatprep.subr.mxu0 0.0
    %775 = vmatpush1.msra.mxu0 0.0
    %776 = vmatprep.subr.mxu0 0.0
    %777 = vmatpush1.msra.mxu0 %v33
    %778 = vmatprep.subr.mxu0 0.0
    %779 = vmatpush1.msra.mxu0 %v32
    %780 = vmatprep.subr.mxu0 0.0
    %781 = vmatpush1.msra.mxu0 %v31
    %782 = vmatprep.subr.mxu0 0.0
    %783 = vmatpush1.msra.mxu0 %v30
    %784 = vmatprep.subr.mxu0 0.0
    %785 = vmatpush2.msra.mxu0 0.0
    %786 = vmatprep.subr.mxu0 0.0
    %787 = vmatpush2.msra.mxu0 0.0
    %788 = vmatprep.subr.mxu0 0.0
    %789 = vmatpush2.msra.mxu0 0.0
    %790 = vmatprep.subr.mxu0 0.0
    %791 = vmatpush2.msra.mxu0 0.0
    %792 = vmatprep.subr.mxu0 0.0
    %793 = vmatpush2.msra.mxu0 0.0
    %794 = vmatprep.subr.mxu0 0.0
    %795 = vmatpush2.msra.mxu0 0.0
    %796 = vmatprep.subr.mxu0 0.0
    %797 = vmatpush2.msra.mxu0 0.0
    %798 = vmatprep.subr.mxu0 0.0
    %799 = vmatpush2.msra.mxu0 0.0
    %800 = vmatprep.subr.mxu0 0.0
    %801 = vmatpush2.msra.mxu0 0.0
    %802 = vmatprep.subr.mxu0 0.0
    %803 = vmatpush2.msra.mxu0 0.0
    %804 = vmatprep.subr.mxu0 0.0
    %805 = vmatpush2.msra.mxu0 0.0
    %806 = vmatprep.subr.mxu0 0.0
    %807 = vmatpush2.msra.mxu0 0.0
    %808 = vmatprep.subr.mxu0 0.0
    %809 = vmatpush2.msra.mxu0 0.0
    %810 = vmatprep.subr.mxu0 0.0
    %811 = vmatpush2.msra.mxu0 0.0
    %812 = vmatprep.subr.mxu0 0.0
    %813 = vmatpush2.msra.mxu0 0.0
    %814 = vmatprep.subr.mxu0 0.0
    %815 = vmatpush2.msra.mxu0 0.0
    %816 = vmatprep.mubr.f32.mxu0 0.0
    %817 = vmatmul.mubr.f32.gmra.mxu0 %v750
    %v818 = vpop.f32.mrf.mxu0
    %v819 = vadd.f32 0.0, %v818
    %v820 = vpop.f32.mrf.mxu0
    %821 = vdwg.mxu0
    %v822 = vadd.f32 %v748, %v819
    %v823 = vxor.u32 %v822, 2147483648
    %v824 = vmul.f32 %v823, 1.442695
    %v825 = vpow.pop %v824
    %v826 = vadd.f32 %v825, 1.0
    %v827 = vrcp.pop %v826
    %v828 = vmul.f32 1.0, %v827
    %v829 = vmul.f32 %v828, %v37
    %v830 = vadd.f32 %v829, %v38
    %832 = vrot.lane.b32.xlu0 %v830, 96
    %v833 = vpop.permute.xlu0 %832
    %v835 = vmul.f32 %v830, %v833
    %836 = vrot.lane.b32.xlu0 %v830, 64
    %v837 = vpop.permute.xlu0 %836
    %v839 = vmul.f32 %v739, %v837
    %v840 = vadd.f32 %v835, %v839
    %v841 = vtanh.pop %v840
    %842 = vrot.lane.b32.xlu0 %v830, 32
    %v843 = vpop.permute.xlu0 %842
    %v845 = vmul.f32 %v841, %v843
    %s846 = scalar_lea.vmem [#allocation2], 56
    %847 = vst.msk [vmem:[%s846] sm:$0xff] %vm42, %v845
    %848 = vst.msk [vmem:[#allocation6] sm:$0xff] %vm42, %v845
    %849 = vst.msk [vmem:[#allocation7] sm:$0xff] %vm42, %v840
    %v850 = vld [vmem:[#allocation2] sm:$0xff]
    %v851 = vld [vmem:[#allocation2 + $0x8] sm:$0xff]
    %v852 = vld [vmem:[#allocation2 + $0x10] sm:$0xff]
    %v853 = vld [vmem:[#allocation2 + $0x18] sm:$0xff]
    %v854 = vld [vmem:[#allocation2 + $0x20] sm:$0xff]
    %v855 = vld [vmem:[#allocation2 + $0x28] sm:$0xff]
    %v856 = vld [vmem:[#allocation2 + $0x30] sm:$0xff]
    %v857 = vld [vmem:[#allocation2 + $0x38] sm:$0xff]
    %v858 = vld [vmem:[%s4] sm:$0xff]
    %v859 = vld [vmem:[%s4 + $0x8] sm:$0xff]
    %v860 = vld [vmem:[%s4 + $0x10] sm:$0xff]
    %v861 = vld [vmem:[%s4 + $0x18] sm:$0xff]
    %v862 = vld [vmem:[%s5] sm:$0x1]
    %v864 = vlaneseq
    %v865 = vshrl.u32 %v864, 7
    %v866 = vsub.s32 0, %v865
    %v867 = vrot.slane %v862, %v866
    %v870 = vsel %vm42, %v850, 0
    %v873 = vsel %vm42, %v851, 0
    %v876 = vsel %vm42, %v852, 0
    %v879 = vsel %vm42, %v853, 0
    %v882 = vsel %vm42, %v854, 0
    %v885 = vsel %vm42, %v855, 0
    %v888 = vsel %vm42, %v856, 0
    %v891 = vsel %vm42, %v857, 0
    %893 = vmatprep.subr.mxu0 0.0
    %894 = vmatpush1.msra.mxu0 0.0
    %895 = vmatprep.subr.mxu0 0.0
    %896 = vmatpush1.msra.mxu0 0.0
    %897 = vmatprep.subr.mxu0 0.0
    %898 = vmatpush1.msra.mxu0 0.0
    %899 = vmatprep.subr.mxu0 0.0
    %900 = vmatpush1.msra.mxu0 0.0
    %901 = vmatprep.subr.mxu0 0.0
    %902 = vmatpush1.msra.mxu0 0.0
    %903 = vmatprep.subr.mxu0 0.0
    %904 = vmatpush1.msra.mxu0 0.0
    %905 = vmatprep.subr.mxu0 0.0
    %906 = vmatpush1.msra.mxu0 0.0
    %907 = vmatprep.subr.mxu0 0.0
    %908 = vmatpush1.msra.mxu0 0.0
    %909 = vmatprep.subr.mxu0 0.0
    %910 = vmatpush1.msra.mxu0 0.0
    %911 = vmatprep.subr.mxu0 0.0
    %912 = vmatpush1.msra.mxu0 0.0
    %913 = vmatprep.subr.mxu0 0.0
    %914 = vmatpush1.msra.mxu0 0.0
    %915 = vmatprep.subr.mxu0 0.0
    %916 = vmatpush1.msra.mxu0 0.0
    %917 = vmatprep.subr.mxu0 0.0
    %918 = vmatpush1.msra.mxu0 %v861
    %919 = vmatprep.subr.mxu0 0.0
    %920 = vmatpush1.msra.mxu0 %v860
    %921 = vmatprep.subr.mxu0 0.0
    %922 = vmatpush1.msra.mxu0 %v859
    %923 = vmatprep.subr.mxu0 0.0
    %924 = vmatpush1.msra.mxu0 %v858
    %925 = vmatprep.subr.mxu0 0.0
    %926 = vmatpush2.msra.mxu0 0.0
    %927 = vmatprep.subr.mxu0 0.0
    %928 = vmatpush2.msra.mxu0 0.0
    %929 = vmatprep.subr.mxu0 0.0
    %930 = vmatpush2.msra.mxu0 0.0
    %931 = vmatprep.subr.mxu0 0.0
    %932 = vmatpush2.msra.mxu0 0.0
    %933 = vmatprep.subr.mxu0 0.0
    %934 = vmatpush2.msra.mxu0 0.0
    %935 = vmatprep.subr.mxu0 0.0
    %936 = vmatpush2.msra.mxu0 0.0
    %937 = vmatprep.subr.mxu0 0.0
    %938 = vmatpush2.msra.mxu0 0.0
    %939 = vmatprep.subr.mxu0 0.0
    %940 = vmatpush2.msra.mxu0 0.0
    %941 = vmatprep.subr.mxu0 0.0
    %942 = vmatpush2.msra.mxu0 0.0
    %943 = vmatprep.subr.mxu0 0.0
    %944 = vmatpush2.msra.mxu0 0.0
    %945 = vmatprep.subr.mxu0 0.0
    %946 = vmatpush2.msra.mxu0 0.0
    %947 = vmatprep.subr.mxu0 0.0
    %948 = vmatpush2.msra.mxu0 0.0
    %949 = vmatprep.subr.mxu0 0.0
    %950 = vmatpush2.msra.mxu0 0.0
    %951 = vmatprep.subr.mxu0 0.0
    %952 = vmatpush2.msra.mxu0 0.0
    %953 = vmatprep.subr.mxu0 0.0
    %954 = vmatpush2.msra.mxu0 0.0
    %955 = vmatprep.subr.mxu0 0.0
    %956 = vmatpush2.msra.mxu0 0.0
    %957 = vmatprep.mubr.f32.mxu0 0.0
    %958 = vmatmul.mubr.f32.gmra.mxu0 %v870
    %v959 = vpop.f32.mrf.mxu0
    %v960 = vadd.f32 %v867, %v959
    %v961 = vpop.f32.mrf.mxu0
    %962 = vmatprep.mubr.f32.mxu0 0.0
    %963 = vmatmul.mubr.f32.gmra.mxu0 %v873
    %v964 = vpop.f32.mrf.mxu0
    %v965 = vadd.f32 %v867, %v964
    %v966 = vpop.f32.mrf.mxu0
    %967 = vmatprep.mubr.f32.mxu0 0.0
    %968 = vmatmul.mubr.f32.gmra.mxu0 %v876
    %v969 = vpop.f32.mrf.mxu0
    %v970 = vadd.f32 %v867, %v969
    %v971 = vpop.f32.mrf.mxu0
    %972 = vmatprep.mubr.f32.mxu0 0.0
    %973 = vmatmul.mubr.f32.gmra.mxu0 %v879
    %v974 = vpop.f32.mrf.mxu0
    %v975 = vadd.f32 %v867, %v974
    %v976 = vpop.f32.mrf.mxu0
    %977 = vmatprep.mubr.f32.mxu0 0.0
    %978 = vmatmul.mubr.f32.gmra.mxu0 %v882
    %v979 = vpop.f32.mrf.mxu0
    %v980 = vadd.f32 %v867, %v979
    %v981 = vpop.f32.mrf.mxu0
    %982 = vmatprep.mubr.f32.mxu0 0.0
    %983 = vmatmul.mubr.f32.gmra.mxu0 %v885
    %v984 = vpop.f32.mrf.mxu0
    %v985 = vadd.f32 %v867, %v984
    %v986 = vpop.f32.mrf.mxu0
    %987 = vmatprep.mubr.f32.mxu0 0.0
    %988 = vmatmul.mubr.f32.gmra.mxu0 %v888
    %v989 = vpop.f32.mrf.mxu0
    %v990 = vadd.f32 %v867, %v989
    %v991 = vpop.f32.mrf.mxu0
    %992 = vmatprep.mubr.f32.mxu0 0.0
    %993 = vmatmul.mubr.f32.gmra.mxu0 %v891
    %v994 = vpop.f32.mrf.mxu0
    %v995 = vadd.f32 %v867, %v994
    %v996 = vpop.f32.mrf.mxu0
    %997 = vdwg.mxu0
    %vm998 = vcmask 523264
    %999 = vst.msk [vmem:[#allocation4] sm:$0xff] %vm998, %v960
    %1000 = vst.msk [vmem:[#allocation4 + $0x8] sm:$0xff] %vm998, %v965
    %1001 = vst.msk [vmem:[#allocation4 + $0x10] sm:$0xff] %vm998, %v970
    %1002 = vst.msk [vmem:[#allocation4 + $0x18] sm:$0xff] %vm998, %v975
    %1003 = vst.msk [vmem:[#allocation4 + $0x20] sm:$0xff] %vm998, %v980
    %1004 = vst.msk [vmem:[#allocation4 + $0x28] sm:$0xff] %vm998, %v985
    %1005 = vst.msk [vmem:[#allocation4 + $0x30] sm:$0xff] %vm998, %v990
    %1006 = vst.msk [vmem:[#allocation4 + $0x38] sm:$0xff] %vm998, %v995
    // Predicated region
    $region26: #{text_generation_forward.1} parent=1 // pred_check
      _
    $region27: #{text_generation_forward.1} parent=1 // pred_check_branch
      %1008 = sbr.rel (0) target = $region29
    $region28: #{text_generation_forward.1} parent=1 // pred_region
      %s1010 = ssub.s32 1024, 1024
      %1011 = vsyncadd [#allocation3], %s1010
      %s1012 = sshll.u32 [#allocation2], 4
      %s1013 = int_to_ptr.vmem [resolvable:$true] %s1012
      %1018 = dma.vmem_to_hbm [thread:$0]  %s1013, 1024, %s6, [#allocation3], 128, 128, 8
    $region29: #{text_generation_forward.1} parent=1 // pred_fallthru
      _
    // Predicated region
    $region30: #{text_generation_forward.1} parent=1 // pred_check
      _
    $region31: #{text_generation_forward.1} parent=1 // pred_check_branch
      %1020 = sbr.rel (0) target = $region33
    $region32: #{text_generation_forward.1} parent=1 // pred_region
      %s1022 = ssub.s32 1024, 1024
      %1023 = vsyncadd [#allocation5], %s1022
      %s1024 = sshll.u32 [#allocation4], 4
      %s1025 = int_to_ptr.vmem [resolvable:$true] %s1024
      %1030 = dma.vmem_to_hbm [thread:$0]  %s1025, 1024, %s7, [#allocation5], 128, 128, 8
    $region33: #{text_generation_forward.1} parent=1 // pred_fallthru
      _
    // Predicated region
    $region34: #{text_generation_forward.1} parent=1 // pred_check
      _
    $region35: #{text_generation_forward.1} parent=1 // pred_check_branch
      %1032 = sbr.rel (0) target = $region37
    $region36: #{text_generation_forward.1} parent=1 // pred_region
      %s1034 = ssub.s32 128, 128
      %1035 = vsyncadd [#allocation5], %s1034
      %s1037 = sshll.u32 [#allocation6], 4
      %s1038 = int_to_ptr.vmem [resolvable:$true] %s1037
      %1040 = dma.vmem_to_hbm [thread:$0]  %s1038, 128, %s8, [#allocation5]
    $region37: #{text_generation_forward.1} parent=1 // pred_fallthru
      _
    // Predicated region
    $region38: #{text_generation_forward.1} parent=1 // pred_check
      _
    $region39: #{text_generation_forward.1} parent=1 // pred_check_branch
      %1042 = sbr.rel (0) target = $region41
    $region40: #{text_generation_forward.1} parent=1 // pred_region
      %s1044 = ssub.s32 128, 128
      %1045 = vsyncadd [#allocation8], %s1044
      %s1047 = sshll.u32 [#allocation7], 4
      %s1048 = int_to_ptr.vmem [resolvable:$true] %s1047
      %1050 = dma.vmem_to_hbm [thread:$0]  %s1048, 128, %s9, [#allocation8]
    $region41: #{text_generation_forward.1} parent=1 // pred_fallthru
      _
    // Predicated region
    $region42: #{text_generation_forward.1} parent=1 // pred_check
      _
    $region43: #{text_generation_forward.1} parent=1 // pred_check_branch
      %1052 = sbr.rel (0) target = $region45
    $region44: #{text_generation_forward.1} parent=1 // pred_region
      %1053 = dma.done [#allocation3], 1024
    $region45: #{text_generation_forward.1} parent=1 // pred_fallthru
      _
    // Predicated region
    $region46: #{text_generation_forward.1} parent=1 // pred_check
      _
    $region47: #{text_generation_forward.1} parent=1 // pred_check_branch
      %1055 = sbr.rel (0) target = $region49
    $region48: #{text_generation_forward.1} parent=1 // pred_region
      %1056 = dma.done [#allocation5], 1024
    $region49: #{text_generation_forward.1} parent=1 // pred_fallthru
      _
    // Predicated region
    $region50: #{text_generation_forward.1} parent=1 // pred_check
      _
    $region51: #{text_generation_forward.1} parent=1 // pred_check_branch
      %1058 = sbr.rel (0) target = $region53
    $region52: #{text_generation_forward.1} parent=1 // pred_region
      %1059 = dma.done [#allocation5], 128
    $region53: #{text_generation_forward.1} parent=1 // pred_fallthru
      _
    // Predicated region
    $region54: #{text_generation_forward.1} parent=1 // pred_check
      _
    $region55: #{text_generation_forward.1} parent=1 // pred_check_branch
      %1061 = sbr.rel (0) target = $region57
    $region56: #{text_generation_forward.1} parent=1 // pred_region
      %1062 = dma.done [#allocation8], 128
    $region57: #{text_generation_forward.1} parent=1 // pred_fallthru
      _
    %1063 = vsyncpa [#allocation3], 1
    %1064 = vsyncpa [#allocation5], 1
    %1065 = vsyncpa [#allocation8], 1

</llo_original>
